<compile_context>
chip_gen: v5e
topology: v5e:2x2
jax: 0.10.0
libtpu: 0.0.40
codegen_flags: <defaults>
</compile_context>

<pallas_src>
import jax
import jax.numpy as jnp
from jax.experimental import pallas as pl
from jax.experimental.pallas import tpu as pltpu

INPUT_SIZE = 1
HIDDEN = 30
OUTPUT = 1
NUM_LAYERS = 3
HP = 32                      # per-gate padded lane width (30 -> 32)


def lstm_kernel(x_ref, w0row_ref, b0_ref, whh0_ref, wihU_ref, whhU_ref,
                bU_ref, wlin_ref, blin_ref, out_ref):
    # x_ref:     (T, 1)             raw scalar input sequence
    # w0row_ref: (1, 4*HP)          layer-0 W_ih row (input_size==1), g-cols x2
    # b0_ref:    (1, 4*HP)          layer-0 combined bias, g-cols x2
    # whh0_ref:  (HP, 4*HP)         layer-0 hidden->gates weights (transposed)
    # wihU_ref:  (L-1, HP, 4*HP)    W_ih^T for layers 1..L-1 (padded, g-cols x2)
    # whhU_ref:  (L-1, HP, 4*HP)    W_hh^T for layers 1..L-1 (padded, g-cols x2)
    # bU_ref:    (L-1, 1, 4*HP)     combined biases for layers 1..L-1
    # wlin_ref:  (1, HP)            final linear weight (padded row)
    # blin_ref:  (1, 1)             final linear bias
    # out_ref:   (1, 1)             y_pred[-1]
    T = x_ref.shape[0]
    hp = whh0_ref.shape[0]
    L = wihU_ref.shape[0] + 1

    # Hoist every loop-invariant weight/bias out of the time loop (single load).
    whh0 = whh0_ref[...]                                 # (HP, 4*HP)
    wihU = [wihU_ref[l] for l in range(L - 1)]           # each (HP, 4*HP)
    whhU = [whhU_ref[l] for l in range(L - 1)]           # each (HP, 4*HP)
    bU = [bU_ref[l] for l in range(L - 1)]               # each (1, 4*HP)

    # Precompute all T layer-0 gate pre-activations at once (input_size == 1):
    # xproj[t] = x[t] * w_ih0_row + (b_ih0 + b_hh0)   -- (T, 4*HP), one vreg.
    xproj = x_ref[...] * w0row_ref[...] + b0_ref[...]

    def cell(pre, c_prev):
        # One sigmoid over the whole 4-gate vector; the g gate uses
        # tanh(z) = 2*sigmoid(2z) - 1 (its pre-activation was pre-doubled).
        a = jax.nn.sigmoid(pre)
        i_g = a[:, 0 * hp:1 * hp]
        f_g = a[:, 1 * hp:2 * hp]
        g_g = 2.0 * a[:, 2 * hp:3 * hp] - 1.0
        o_g = a[:, 3 * hp:4 * hp]
        c_new = f_g * c_prev + i_g * g_g
        h_new = o_g * jnp.tanh(c_new)
        return h_new, c_new

    # h / c live in registers (values), not VMEM scratch.
    h = [jnp.zeros((1, hp), jnp.float32) for _ in range(L)]
    c = [jnp.zeros((1, hp), jnp.float32) for _ in range(L)]

    # Fully unrolled time loop (T is a small static shape) -> the scheduler can
    # overlap independent cells across the layer/time wavefront.
    for t in range(T):
        # Layer 0: input projection already precomputed; only the h-dot remains.
        pre0 = xproj[t:t + 1, :] + jnp.dot(h[0], whh0,
                                           preferred_element_type=jnp.float32)
        h[0], c[0] = cell(pre0, c[0])
        x = h[0]
        # Layers 1..L-1: two independent split matmuls (no lane concat).
        for l in range(1, L):
            pre = (jnp.dot(x, wihU[l - 1], preferred_element_type=jnp.float32)
                   + jnp.dot(h[l], whhU[l - 1],
                             preferred_element_type=jnp.float32)
                   + bU[l - 1])
            h[l], c[l] = cell(pre, c[l])
            x = h[l]

    # y_pred[-1] = Linear(h_top at final step); lane-reduce instead of an N=1 matmul.
    out_ref[...] = (jnp.sum(h[L - 1] * wlin_ref[...], axis=1, keepdims=True)
                    + blin_ref[...])


def init_params(key, input_size=INPUT_SIZE, hidden=HIDDEN, output=OUTPUT,
                num_layers=NUM_LAYERS):
    """PyTorch-layout parameters (nn.LSTM / nn.Linear shapes)."""
    keys = jax.random.split(key, 4 * num_layers + 2)
    k = 1.0 / jnp.sqrt(hidden)
    layers = []
    for layer in range(num_layers):
        in_dim = input_size if layer == 0 else hidden
        kw = keys[4 * layer:4 * layer + 4]
        w_ih = jax.random.uniform(kw[0], (4 * hidden, in_dim), jnp.float32, -k, k)
        w_hh = jax.random.uniform(kw[1], (4 * hidden, hidden), jnp.float32, -k, k)
        b_ih = jax.random.uniform(kw[2], (4 * hidden,), jnp.float32, -k, k)
        b_hh = jax.random.uniform(kw[3], (4 * hidden,), jnp.float32, -k, k)
        layers.append((w_ih, w_hh, b_ih, b_hh))
    w_lin = jax.random.uniform(keys[-2], (output, hidden), jnp.float32, -k, k)
    b_lin = jax.random.uniform(keys[-1], (output,), jnp.float32, -k, k)
    return layers, w_lin, b_lin


def _pad_gate_cols(w, hidden, hp):
    """(rows, 4*hidden) -> (rows, 4*hp); gate g occupies cols [g*hp, g*hp+hidden)."""
    rows = w.shape[0]
    out = jnp.zeros((rows, 4 * hp), jnp.float32)
    for g in range(4):
        out = out.at[:, g * hp:g * hp + hidden].set(w[:, g * hidden:(g + 1) * hidden])
    return out


def _pad_rows(w, hp):
    """(rows, cols) -> (hp, cols), zero-padded rows."""
    out = jnp.zeros((hp, w.shape[1]), jnp.float32)
    return out.at[:w.shape[0], :].set(w)


def pack_params(params, hidden=HIDDEN, hp=HP):
    """Convert PyTorch-layout params to the padded / pre-scaled kernel layout."""
    layers, w_lin, b_lin = params
    # tanh(z) = 2*sigmoid(2z) - 1  ->  pre-double the g-gate pre-activation by
    # scaling its weight/bias columns by 2 at pack time.
    gscale = jnp.ones((4 * hp,), jnp.float32).at[2 * hp:3 * hp].set(2.0)

    w_ih0, w_hh0, b_ih0, b_hh0 = layers[0]
    w0row = _pad_gate_cols(w_ih0[:, 0][None, :], hidden, hp) * gscale      # (1, 4*hp)
    b0 = _pad_gate_cols((b_ih0 + b_hh0)[None, :], hidden, hp) * gscale     # (1, 4*hp)
    whh0 = _pad_rows(_pad_gate_cols(w_hh0.T, hidden, hp), hp) * gscale     # (hp, 4*hp)

    wih_list, whh_list, b_list = [], [], []
    for (w_ih, w_hh, b_ih, b_hh) in layers[1:]:
        wih_list.append(_pad_rows(_pad_gate_cols(w_ih.T, hidden, hp), hp) * gscale)
        whh_list.append(_pad_rows(_pad_gate_cols(w_hh.T, hidden, hp), hp) * gscale)
        b_list.append(_pad_gate_cols((b_ih + b_hh)[None, :], hidden, hp) * gscale)
    wihU = jnp.stack(wih_list)                   # (L-1, hp, 4*hp)
    whhU = jnp.stack(whh_list)                   # (L-1, hp, 4*hp)
    bU = jnp.stack(b_list)                       # (L-1, 1, 4*hp)

    wlin = jnp.zeros((1, hp), jnp.float32).at[:, :hidden].set(w_lin)        # (1, hp)
    blin = b_lin.reshape(1, 1)
    return w0row, b0, whh0, wihU, whhU, bU, wlin, blin


def lstm_forward(input_seq, packed):
    """Matches LSTM.forward: returns y_pred[-1] of shape (output_size,)."""
    w0row, b0, whh0, wihU, whhU, bU, wlin, blin = packed
    T = input_seq.shape[0]
    x2d = input_seq.reshape(T, 1).astype(jnp.float32)

    out = pl.pallas_call(
        lstm_kernel,
        out_shape=jax.ShapeDtypeStruct((1, 1), jnp.float32),
        in_specs=[pl.BlockSpec(memory_space=pltpu.MemorySpace.VMEM)] * 9,
        out_specs=pl.BlockSpec(memory_space=pltpu.MemorySpace.VMEM),
    )(x2d, w0row, b0, whh0, wihU, whhU, bU, wlin, blin)
    return out[0]  # shape (OUTPUT,) == y_pred[-1]


def lstm_reference(input_seq, params):
    """Pure-JAX reference of the PyTorch forward (inference path, zero state)."""
    layers, w_lin, b_lin = params
    T = input_seq.shape[0]
    hid = layers[0][1].shape[1]
    x_seq = input_seq.reshape(T, 1).astype(jnp.float32)
    h = [jnp.zeros((hid,), jnp.float32) for _ in layers]
    c = [jnp.zeros((hid,), jnp.float32) for _ in layers]
    for t in range(T):
        x = x_seq[t]
        for l, (w_ih, w_hh, b_ih, b_hh) in enumerate(layers):
            g = w_ih @ x + w_hh @ h[l] + b_ih + b_hh
            i_g = jax.nn.sigmoid(g[0:hid])
            f_g = jax.nn.sigmoid(g[hid:2 * hid])
            g_g = jnp.tanh(g[2 * hid:3 * hid])
            o_g = jax.nn.sigmoid(g[3 * hid:4 * hid])
            c[l] = f_g * c[l] + i_g * g_g
            h[l] = o_g * jnp.tanh(c[l])
            x = h[l]
    return w_lin @ h[-1] + b_lin


if __name__ == "__main__":
    key = jax.random.PRNGKey(0)
    pkey, xkey = jax.random.split(key)
    params = init_params(pkey)
    packed = pack_params(params)

    seq_len = 8
    input_seq = jax.random.normal(xkey, (seq_len,), jnp.float32)

    y = lstm_forward(input_seq, packed)
    jax.block_until_ready(y)
    assert y.shape == (OUTPUT,)

    y_ref = lstm_reference(input_seq, params)
    assert jnp.allclose(y, y_ref, rtol=1e-3, atol=1e-3), (y, y_ref)

    print("KERNEL_OK")
</pallas_src>

<mosaic_0001>
module attributes {stable_mosaic.version = 11 : i64} {
  func.func @lstm_kernel(%arg0: memref<8x1xf32, #tpu.memory_space<vmem>>, %arg1: memref<1x128xf32, #tpu.memory_space<vmem>>, %arg2: memref<1x128xf32, #tpu.memory_space<vmem>>, %arg3: memref<32x128xf32, #tpu.memory_space<vmem>>, %arg4: memref<2x32x128xf32, #tpu.memory_space<vmem>>, %arg5: memref<2x32x128xf32, #tpu.memory_space<vmem>>, %arg6: memref<2x1x128xf32, #tpu.memory_space<vmem>>, %arg7: memref<1x32xf32, #tpu.memory_space<vmem>>, %arg8: memref<1x1xf32, #tpu.memory_space<vmem>>, %arg9: memref<1x1xf32, #tpu.memory_space<vmem>>) attributes {dimension_semantics = [], scalar_prefetch = 0 : i64, scratch_operands = 0 : i64, tpu.core_type = #tpu.core_type<tc>} {
    %c0 = arith.constant 0 : index
    %c0_0 = arith.constant 0 : index
    %0 = vector.load %arg3[%c0, %c0_0] : memref<32x128xf32, #tpu.memory_space<vmem>>, vector<32x128xf32>
    %c0_1 = arith.constant 0 : index
    %c0_2 = arith.constant 0 : index
    %c0_3 = arith.constant 0 : index
    %1 = vector.load %arg4[%c0_1, %c0_2, %c0_3] : memref<2x32x128xf32, #tpu.memory_space<vmem>>, vector<1x32x128xf32>
    %2 = vector.shape_cast %1 : vector<1x32x128xf32> to vector<32x128xf32>
    %c1 = arith.constant 1 : index
    %c0_4 = arith.constant 0 : index
    %c0_5 = arith.constant 0 : index
    %3 = vector.load %arg4[%c1, %c0_4, %c0_5] : memref<2x32x128xf32, #tpu.memory_space<vmem>>, vector<1x32x128xf32>
    %4 = vector.shape_cast %3 : vector<1x32x128xf32> to vector<32x128xf32>
    %c0_6 = arith.constant 0 : index
    %c0_7 = arith.constant 0 : index
    %c0_8 = arith.constant 0 : index
    %5 = vector.load %arg5[%c0_6, %c0_7, %c0_8] : memref<2x32x128xf32, #tpu.memory_space<vmem>>, vector<1x32x128xf32>
    %6 = vector.shape_cast %5 : vector<1x32x128xf32> to vector<32x128xf32>
    %c1_9 = arith.constant 1 : index
    %c0_10 = arith.constant 0 : index
    %c0_11 = arith.constant 0 : index
    %7 = vector.load %arg5[%c1_9, %c0_10, %c0_11] : memref<2x32x128xf32, #tpu.memory_space<vmem>>, vector<1x32x128xf32>
    %8 = vector.shape_cast %7 : vector<1x32x128xf32> to vector<32x128xf32>
    %c0_12 = arith.constant 0 : index
    %c0_13 = arith.constant 0 : index
    %c0_14 = arith.constant 0 : index
    %9 = vector.load %arg6[%c0_12, %c0_13, %c0_14] : memref<2x1x128xf32, #tpu.memory_space<vmem>>, vector<1x1x128xf32>
    %10 = vector.shape_cast %9 : vector<1x1x128xf32> to vector<1x128xf32>
    %c1_15 = arith.constant 1 : index
    %c0_16 = arith.constant 0 : index
    %c0_17 = arith.constant 0 : index
    %11 = vector.load %arg6[%c1_15, %c0_16, %c0_17] : memref<2x1x128xf32, #tpu.memory_space<vmem>>, vector<1x1x128xf32>
    %12 = vector.shape_cast %11 : vector<1x1x128xf32> to vector<1x128xf32>
    %c0_18 = arith.constant 0 : index
    %c0_19 = arith.constant 0 : index
    %13 = vector.load %arg0[%c0_18, %c0_19] : memref<8x1xf32, #tpu.memory_space<vmem>>, vector<8x1xf32>
    %c0_20 = arith.constant 0 : index
    %c0_21 = arith.constant 0 : index
    %14 = vector.load %arg1[%c0_20, %c0_21] : memref<1x128xf32, #tpu.memory_space<vmem>>, vector<1x128xf32>
    %15 = vector.broadcast %13 : vector<8x1xf32> to vector<8x128xf32>
    %16 = vector.broadcast %14 : vector<1x128xf32> to vector<8x128xf32>
    %17 = arith.mulf %15, %16 : vector<8x128xf32>
    %c0_22 = arith.constant 0 : index
    %c0_23 = arith.constant 0 : index
    %18 = vector.load %arg2[%c0_22, %c0_23] : memref<1x128xf32, #tpu.memory_space<vmem>>, vector<1x128xf32>
    %19 = vector.broadcast %18 : vector<1x128xf32> to vector<8x128xf32>
    %20 = arith.addf %17, %19 : vector<8x128xf32>
    %cst = arith.constant 0.000000e+00 : f32
    %21 = vector.broadcast %cst : f32 to vector<1x32xf32>
    %cst_24 = arith.constant 0.000000e+00 : f32
    %22 = vector.broadcast %cst_24 : f32 to vector<1x32xf32>
    %cst_25 = arith.constant 0.000000e+00 : f32
    %23 = vector.broadcast %cst_25 : f32 to vector<1x32xf32>
    %cst_26 = arith.constant 0.000000e+00 : f32
    %24 = vector.broadcast %cst_26 : f32 to vector<1x32xf32>
    %cst_27 = arith.constant 0.000000e+00 : f32
    %25 = vector.broadcast %cst_27 : f32 to vector<1x32xf32>
    %cst_28 = arith.constant 0.000000e+00 : f32
    %26 = vector.broadcast %cst_28 : f32 to vector<1x32xf32>
    %27 = vector.extract_strided_slice %20 {offsets = [0, 0], sizes = [1, 128], strides = [1, 1]} : vector<8x128xf32> to vector<1x128xf32>
    %cst_29 = arith.constant dense<0.000000e+00> : vector<1x128xf32>
    %28 = tpu.matmul %21, %0, %cst_29 {dimension_numbers = #tpu.dot_dimension_numbers<[1], [0], [0], [1], [0, 0, 1, 1], [], []>} : vector<1x32xf32>, vector<32x128xf32>, vector<1x128xf32> -> vector<1x128xf32>
    %29 = arith.addf %27, %28 : vector<1x128xf32>
    %30 = arith.negf %29 : vector<1x128xf32>
    %31 = math.exp %30 : vector<1x128xf32>
    %cst_30 = arith.constant 1.000000e+00 : f32
    %32 = vector.broadcast %cst_30 : f32 to vector<1x128xf32>
    %33 = arith.addf %32, %31 : vector<1x128xf32>
    %34 = arith.divf %32, %33 : vector<1x128xf32>
    %35 = vector.extract_strided_slice %34 {offsets = [0, 0], sizes = [1, 32], strides = [1, 1]} : vector<1x128xf32> to vector<1x32xf32>
    %36 = vector.extract_strided_slice %34 {offsets = [0, 32], sizes = [1, 32], strides = [1, 1]} : vector<1x128xf32> to vector<1x32xf32>
    %37 = vector.extract_strided_slice %34 {offsets = [0, 64], sizes = [1, 32], strides = [1, 1]} : vector<1x128xf32> to vector<1x32xf32>
    %cst_31 = arith.constant 2.000000e+00 : f32
    %38 = vector.broadcast %cst_31 : f32 to vector<1x32xf32>
    %39 = arith.mulf %38, %37 : vector<1x32xf32>
    %cst_32 = arith.constant 1.000000e+00 : f32
    %40 = vector.broadcast %cst_32 : f32 to vector<1x32xf32>
    %41 = arith.subf %39, %40 : vector<1x32xf32>
    %42 = vector.extract_strided_slice %34 {offsets = [0, 96], sizes = [1, 32], strides = [1, 1]} : vector<1x128xf32> to vector<1x32xf32>
    %43 = arith.mulf %36, %24 : vector<1x32xf32>
    %44 = arith.mulf %35, %41 : vector<1x32xf32>
    %45 = arith.addf %43, %44 : vector<1x32xf32>
    %46 = math.tanh %45 : vector<1x32xf32>
    %47 = arith.mulf %42, %46 : vector<1x32xf32>
    %cst_33 = arith.constant dense<0.000000e+00> : vector<1x128xf32>
    %48 = tpu.matmul %47, %2, %cst_33 {dimension_numbers = #tpu.dot_dimension_numbers<[1], [0], [0], [1], [0, 0, 1, 1], [], []>} : vector<1x32xf32>, vector<32x128xf32>, vector<1x128xf32> -> vector<1x128xf32>
    %cst_34 = arith.constant dense<0.000000e+00> : vector<1x128xf32>
    %49 = tpu.matmul %22, %6, %cst_34 {dimension_numbers = #tpu.dot_dimension_numbers<[1], [0], [0], [1], [0, 0, 1, 1], [], []>} : vector<1x32xf32>, vector<32x128xf32>, vector<1x128xf32> -> vector<1x128xf32>
    %50 = arith.addf %48, %49 : vector<1x128xf32>
    %51 = arith.addf %50, %10 : vector<1x128xf32>
    %52 = arith.negf %51 : vector<1x128xf32>
    %53 = math.exp %52 : vector<1x128xf32>
    %cst_35 = arith.constant 1.000000e+00 : f32
    %54 = vector.broadcast %cst_35 : f32 to vector<1x128xf32>
    %55 = arith.addf %54, %53 : vector<1x128xf32>
    %56 = arith.divf %54, %55 : vector<1x128xf32>
    %57 = vector.extract_strided_slice %56 {offsets = [0, 0], sizes = [1, 32], strides = [1, 1]} : vector<1x128xf32> to vector<1x32xf32>
    %58 = vector.extract_strided_slice %56 {offsets = [0, 32], sizes = [1, 32], strides = [1, 1]} : vector<1x128xf32> to vector<1x32xf32>
    %59 = vector.extract_strided_slice %56 {offsets = [0, 64], sizes = [1, 32], strides = [1, 1]} : vector<1x128xf32> to vector<1x32xf32>
    %cst_36 = arith.constant 2.000000e+00 : f32
    %60 = vector.broadcast %cst_36 : f32 to vector<1x32xf32>
    %61 = arith.mulf %60, %59 : vector<1x32xf32>
    %cst_37 = arith.constant 1.000000e+00 : f32
    %62 = vector.broadcast %cst_37 : f32 to vector<1x32xf32>
    %63 = arith.subf %61, %62 : vector<1x32xf32>
    %64 = vector.extract_strided_slice %56 {offsets = [0, 96], sizes = [1, 32], strides = [1, 1]} : vector<1x128xf32> to vector<1x32xf32>
    %65 = arith.mulf %58, %25 : vector<1x32xf32>
    %66 = arith.mulf %57, %63 : vector<1x32xf32>
    %67 = arith.addf %65, %66 : vector<1x32xf32>
    %68 = math.tanh %67 : vector<1x32xf32>
    %69 = arith.mulf %64, %68 : vector<1x32xf32>
    %cst_38 = arith.constant dense<0.000000e+00> : vector<1x128xf32>
    %70 = tpu.matmul %69, %4, %cst_38 {dimension_numbers = #tpu.dot_dimension_numbers<[1], [0], [0], [1], [0, 0, 1, 1], [], []>} : vector<1x32xf32>, vector<32x128xf32>, vector<1x128xf32> -> vector<1x128xf32>
    %cst_39 = arith.constant dense<0.000000e+00> : vector<1x128xf32>
    %71 = tpu.matmul %23, %8, %cst_39 {dimension_numbers = #tpu.dot_dimension_numbers<[1], [0], [0], [1], [0, 0, 1, 1], [], []>} : vector<1x32xf32>, vector<32x128xf32>, vector<1x128xf32> -> vector<1x128xf32>
    %72 = arith.addf %70, %71 : vector<1x128xf32>
    %73 = arith.addf %72, %12 : vector<1x128xf32>
    %74 = arith.negf %73 : vector<1x128xf32>
    %75 = math.exp %74 : vector<1x128xf32>
    %cst_40 = arith.constant 1.000000e+00 : f32
    %76 = vector.broadcast %cst_40 : f32 to vector<1x128xf32>
    %77 = arith.addf %76, %75 : vector<1x128xf32>
    %78 = arith.divf %76, %77 : vector<1x128xf32>
    %79 = vector.extract_strided_slice %78 {offsets = [0, 0], sizes = [1, 32], strides = [1, 1]} : vector<1x128xf32> to vector<1x32xf32>
    %80 = vector.extract_strided_slice %78 {offsets = [0, 32], sizes = [1, 32], strides = [1, 1]} : vector<1x128xf32> to vector<1x32xf32>
    %81 = vector.extract_strided_slice %78 {offsets = [0, 64], sizes = [1, 32], strides = [1, 1]} : vector<1x128xf32> to vector<1x32xf32>
    %cst_41 = arith.constant 2.000000e+00 : f32
    %82 = vector.broadcast %cst_41 : f32 to vector<1x32xf32>
    %83 = arith.mulf %82, %81 : vector<1x32xf32>
    %cst_42 = arith.constant 1.000000e+00 : f32
    %84 = vector.broadcast %cst_42 : f32 to vector<1x32xf32>
    %85 = arith.subf %83, %84 : vector<1x32xf32>
    %86 = vector.extract_strided_slice %78 {offsets = [0, 96], sizes = [1, 32], strides = [1, 1]} : vector<1x128xf32> to vector<1x32xf32>
    %87 = arith.mulf %80, %26 : vector<1x32xf32>
    %88 = arith.mulf %79, %85 : vector<1x32xf32>
    %89 = arith.addf %87, %88 : vector<1x32xf32>
    %90 = math.tanh %89 : vector<1x32xf32>
    %91 = arith.mulf %86, %90 : vector<1x32xf32>
    %92 = vector.extract_strided_slice %20 {offsets = [1, 0], sizes = [1, 128], strides = [1, 1]} : vector<8x128xf32> to vector<1x128xf32>
    %cst_43 = arith.constant dense<0.000000e+00> : vector<1x128xf32>
    %93 = tpu.matmul %47, %0, %cst_43 {dimension_numbers = #tpu.dot_dimension_numbers<[1], [0], [0], [1], [0, 0, 1, 1], [], []>} : vector<1x32xf32>, vector<32x128xf32>, vector<1x128xf32> -> vector<1x128xf32>
    %94 = arith.addf %92, %93 : vector<1x128xf32>
    %95 = arith.negf %94 : vector<1x128xf32>
    %96 = math.exp %95 : vector<1x128xf32>
    %cst_44 = arith.constant 1.000000e+00 : f32
    %97 = vector.broadcast %cst_44 : f32 to vector<1x128xf32>
    %98 = arith.addf %97, %96 : vector<1x128xf32>
    %99 = arith.divf %97, %98 : vector<1x128xf32>
    %100 = vector.extract_strided_slice %99 {offsets = [0, 0], sizes = [1, 32], strides = [1, 1]} : vector<1x128xf32> to vector<1x32xf32>
    %101 = vector.extract_strided_slice %99 {offsets = [0, 32], sizes = [1, 32], strides = [1, 1]} : vector<1x128xf32> to vector<1x32xf32>
    %102 = vector.extract_strided_slice %99 {offsets = [0, 64], sizes = [1, 32], strides = [1, 1]} : vector<1x128xf32> to vector<1x32xf32>
    %cst_45 = arith.constant 2.000000e+00 : f32
    %103 = vector.broadcast %cst_45 : f32 to vector<1x32xf32>
    %104 = arith.mulf %103, %102 : vector<1x32xf32>
    %cst_46 = arith.constant 1.000000e+00 : f32
    %105 = vector.broadcast %cst_46 : f32 to vector<1x32xf32>
    %106 = arith.subf %104, %105 : vector<1x32xf32>
    %107 = vector.extract_strided_slice %99 {offsets = [0, 96], sizes = [1, 32], strides = [1, 1]} : vector<1x128xf32> to vector<1x32xf32>
    %108 = arith.mulf %101, %45 : vector<1x32xf32>
    %109 = arith.mulf %100, %106 : vector<1x32xf32>
    %110 = arith.addf %108, %109 : vector<1x32xf32>
    %111 = math.tanh %110 : vector<1x32xf32>
    %112 = arith.mulf %107, %111 : vector<1x32xf32>
    %cst_47 = arith.constant dense<0.000000e+00> : vector<1x128xf32>
    %113 = tpu.matmul %112, %2, %cst_47 {dimension_numbers = #tpu.dot_dimension_numbers<[1], [0], [0], [1], [0, 0, 1, 1], [], []>} : vector<1x32xf32>, vector<32x128xf32>, vector<1x128xf32> -> vector<1x128xf32>
    %cst_48 = arith.constant dense<0.000000e+00> : vector<1x128xf32>
    %114 = tpu.matmul %69, %6, %cst_48 {dimension_numbers = #tpu.dot_dimension_numbers<[1], [0], [0], [1], [0, 0, 1, 1], [], []>} : vector<1x32xf32>, vector<32x128xf32>, vector<1x128xf32> -> vector<1x128xf32>
    %115 = arith.addf %113, %114 : vector<1x128xf32>
    %116 = arith.addf %115, %10 : vector<1x128xf32>
    %117 = arith.negf %116 : vector<1x128xf32>
    %118 = math.exp %117 : vector<1x128xf32>
    %cst_49 = arith.constant 1.000000e+00 : f32
    %119 = vector.broadcast %cst_49 : f32 to vector<1x128xf32>
    %120 = arith.addf %119, %118 : vector<1x128xf32>
    %121 = arith.divf %119, %120 : vector<1x128xf32>
    %122 = vector.extract_strided_slice %121 {offsets = [0, 0], sizes = [1, 32], strides = [1, 1]} : vector<1x128xf32> to vector<1x32xf32>
    %123 = vector.extract_strided_slice %121 {offsets = [0, 32], sizes = [1, 32], strides = [1, 1]} : vector<1x128xf32> to vector<1x32xf32>
    %124 = vector.extract_strided_slice %121 {offsets = [0, 64], sizes = [1, 32], strides = [1, 1]} : vector<1x128xf32> to vector<1x32xf32>
    %cst_50 = arith.constant 2.000000e+00 : f32
    %125 = vector.broadcast %cst_50 : f32 to vector<1x32xf32>
    %126 = arith.mulf %125, %124 : vector<1x32xf32>
    %cst_51 = arith.constant 1.000000e+00 : f32
    %127 = vector.broadcast %cst_51 : f32 to vector<1x32xf32>
    %128 = arith.subf %126, %127 : vector<1x32xf32>
    %129 = vector.extract_strided_slice %121 {offsets = [0, 96], sizes = [1, 32], strides = [1, 1]} : vector<1x128xf32> to vector<1x32xf32>
    %130 = arith.mulf %123, %67 : vector<1x32xf32>
    %131 = arith.mulf %122, %128 : vector<1x32xf32>
    %132 = arith.addf %130, %131 : vector<1x32xf32>
    %133 = math.tanh %132 : vector<1x32xf32>
    %134 = arith.mulf %129, %133 : vector<1x32xf32>
    %cst_52 = arith.constant dense<0.000000e+00> : vector<1x128xf32>
    %135 = tpu.matmul %134, %4, %cst_52 {dimension_numbers = #tpu.dot_dimension_numbers<[1], [0], [0], [1], [0, 0, 1, 1], [], []>} : vector<1x32xf32>, vector<32x128xf32>, vector<1x128xf32> -> vector<1x128xf32>
    %cst_53 = arith.constant dense<0.000000e+00> : vector<1x128xf32>
    %136 = tpu.matmul %91, %8, %cst_53 {dimension_numbers = #tpu.dot_dimension_numbers<[1], [0], [0], [1], [0, 0, 1, 1], [], []>} : vector<1x32xf32>, vector<32x128xf32>, vector<1x128xf32> -> vector<1x128xf32>
    %137 = arith.addf %135, %136 : vector<1x128xf32>
    %138 = arith.addf %137, %12 : vector<1x128xf32>
    %139 = arith.negf %138 : vector<1x128xf32>
    %140 = math.exp %139 : vector<1x128xf32>
    %cst_54 = arith.constant 1.000000e+00 : f32
    %141 = vector.broadcast %cst_54 : f32 to vector<1x128xf32>
    %142 = arith.addf %141, %140 : vector<1x128xf32>
    %143 = arith.divf %141, %142 : vector<1x128xf32>
    %144 = vector.extract_strided_slice %143 {offsets = [0, 0], sizes = [1, 32], strides = [1, 1]} : vector<1x128xf32> to vector<1x32xf32>
    %145 = vector.extract_strided_slice %143 {offsets = [0, 32], sizes = [1, 32], strides = [1, 1]} : vector<1x128xf32> to vector<1x32xf32>
    %146 = vector.extract_strided_slice %143 {offsets = [0, 64], sizes = [1, 32], strides = [1, 1]} : vector<1x128xf32> to vector<1x32xf32>
    %cst_55 = arith.constant 2.000000e+00 : f32
    %147 = vector.broadcast %cst_55 : f32 to vector<1x32xf32>
    %148 = arith.mulf %147, %146 : vector<1x32xf32>
    %cst_56 = arith.constant 1.000000e+00 : f32
    %149 = vector.broadcast %cst_56 : f32 to vector<1x32xf32>
    %150 = arith.subf %148, %149 : vector<1x32xf32>
    %151 = vector.extract_strided_slice %143 {offsets = [0, 96], sizes = [1, 32], strides = [1, 1]} : vector<1x128xf32> to vector<1x32xf32>
    %152 = arith.mulf %145, %89 : vector<1x32xf32>
    %153 = arith.mulf %144, %150 : vector<1x32xf32>
    %154 = arith.addf %152, %153 : vector<1x32xf32>
    %155 = math.tanh %154 : vector<1x32xf32>
    %156 = arith.mulf %151, %155 : vector<1x32xf32>
    %157 = vector.extract_strided_slice %20 {offsets = [2, 0], sizes = [1, 128], strides = [1, 1]} : vector<8x128xf32> to vector<1x128xf32>
    %cst_57 = arith.constant dense<0.000000e+00> : vector<1x128xf32>
    %158 = tpu.matmul %112, %0, %cst_57 {dimension_numbers = #tpu.dot_dimension_numbers<[1], [0], [0], [1], [0, 0, 1, 1], [], []>} : vector<1x32xf32>, vector<32x128xf32>, vector<1x128xf32> -> vector<1x128xf32>
    %159 = arith.addf %157, %158 : vector<1x128xf32>
    %160 = arith.negf %159 : vector<1x128xf32>
    %161 = math.exp %160 : vector<1x128xf32>
    %cst_58 = arith.constant 1.000000e+00 : f32
    %162 = vector.broadcast %cst_58 : f32 to vector<1x128xf32>
    %163 = arith.addf %162, %161 : vector<1x128xf32>
    %164 = arith.divf %162, %163 : vector<1x128xf32>
    %165 = vector.extract_strided_slice %164 {offsets = [0, 0], sizes = [1, 32], strides = [1, 1]} : vector<1x128xf32> to vector<1x32xf32>
    %166 = vector.extract_strided_slice %164 {offsets = [0, 32], sizes = [1, 32], strides = [1, 1]} : vector<1x128xf32> to vector<1x32xf32>
    %167 = vector.extract_strided_slice %164 {offsets = [0, 64], sizes = [1, 32], strides = [1, 1]} : vector<1x128xf32> to vector<1x32xf32>
    %cst_59 = arith.constant 2.000000e+00 : f32
    %168 = vector.broadcast %cst_59 : f32 to vector<1x32xf32>
    %169 = arith.mulf %168, %167 : vector<1x32xf32>
    %cst_60 = arith.constant 1.000000e+00 : f32
    %170 = vector.broadcast %cst_60 : f32 to vector<1x32xf32>
    %171 = arith.subf %169, %170 : vector<1x32xf32>
    %172 = vector.extract_strided_slice %164 {offsets = [0, 96], sizes = [1, 32], strides = [1, 1]} : vector<1x128xf32> to vector<1x32xf32>
    %173 = arith.mulf %166, %110 : vector<1x32xf32>
    %174 = arith.mulf %165, %171 : vector<1x32xf32>
    %175 = arith.addf %173, %174 : vector<1x32xf32>
    %176 = math.tanh %175 : vector<1x32xf32>
    %177 = arith.mulf %172, %176 : vector<1x32xf32>
    %cst_61 = arith.constant dense<0.000000e+00> : vector<1x128xf32>
    %178 = tpu.matmul %177, %2, %cst_61 {dimension_numbers = #tpu.dot_dimension_numbers<[1], [0], [0], [1], [0, 0, 1, 1], [], []>} : vector<1x32xf32>, vector<32x128xf32>, vector<1x128xf32> -> vector<1x128xf32>
    %cst_62 = arith.constant dense<0.000000e+00> : vector<1x128xf32>
    %179 = tpu.matmul %134, %6, %cst_62 {dimension_numbers = #tpu.dot_dimension_numbers<[1], [0], [0], [1], [0, 0, 1, 1], [], []>} : vector<1x32xf32>, vector<32x128xf32>, vector<1x128xf32> -> vector<1x128xf32>
    %180 = arith.addf %178, %179 : vector<1x128xf32>
    %181 = arith.addf %180, %10 : vector<1x128xf32>
    %182 = arith.negf %181 : vector<1x128xf32>
    %183 = math.exp %182 : vector<1x128xf32>
    %cst_63 = arith.constant 1.000000e+00 : f32
    %184 = vector.broadcast %cst_63 : f32 to vector<1x128xf32>
    %185 = arith.addf %184, %183 : vector<1x128xf32>
    %186 = arith.divf %184, %185 : vector<1x128xf32>
    %187 = vector.extract_strided_slice %186 {offsets = [0, 0], sizes = [1, 32], strides = [1, 1]} : vector<1x128xf32> to vector<1x32xf32>
    %188 = vector.extract_strided_slice %186 {offsets = [0, 32], sizes = [1, 32], strides = [1, 1]} : vector<1x128xf32> to vector<1x32xf32>
    %189 = vector.extract_strided_slice %186 {offsets = [0, 64], sizes = [1, 32], strides = [1, 1]} : vector<1x128xf32> to vector<1x32xf32>
    %cst_64 = arith.constant 2.000000e+00 : f32
    %190 = vector.broadcast %cst_64 : f32 to vector<1x32xf32>
    %191 = arith.mulf %190, %189 : vector<1x32xf32>
    %cst_65 = arith.constant 1.000000e+00 : f32
    %192 = vector.broadcast %cst_65 : f32 to vector<1x32xf32>
    %193 = arith.subf %191, %192 : vector<1x32xf32>
    %194 = vector.extract_strided_slice %186 {offsets = [0, 96], sizes = [1, 32], strides = [1, 1]} : vector<1x128xf32> to vector<1x32xf32>
    %195 = arith.mulf %188, %132 : vector<1x32xf32>
    %196 = arith.mulf %187, %193 : vector<1x32xf32>
    %197 = arith.addf %195, %196 : vector<1x32xf32>
    %198 = math.tanh %197 : vector<1x32xf32>
    %199 = arith.mulf %194, %198 : vector<1x32xf32>
    %cst_66 = arith.constant dense<0.000000e+00> : vector<1x128xf32>
    %200 = tpu.matmul %199, %4, %cst_66 {dimension_numbers = #tpu.dot_dimension_numbers<[1], [0], [0], [1], [0, 0, 1, 1], [], []>} : vector<1x32xf32>, vector<32x128xf32>, vector<1x128xf32> -> vector<1x128xf32>
    %cst_67 = arith.constant dense<0.000000e+00> : vector<1x128xf32>
    %201 = tpu.matmul %156, %8, %cst_67 {dimension_numbers = #tpu.dot_dimension_numbers<[1], [0], [0], [1], [0, 0, 1, 1], [], []>} : vector<1x32xf32>, vector<32x128xf32>, vector<1x128xf32> -> vector<1x128xf32>
    %202 = arith.addf %200, %201 : vector<1x128xf32>
    %203 = arith.addf %202, %12 : vector<1x128xf32>
    %204 = arith.negf %203 : vector<1x128xf32>
    %205 = math.exp %204 : vector<1x128xf32>
    %cst_68 = arith.constant 1.000000e+00 : f32
    %206 = vector.broadcast %cst_68 : f32 to vector<1x128xf32>
    %207 = arith.addf %206, %205 : vector<1x128xf32>
    %208 = arith.divf %206, %207 : vector<1x128xf32>
    %209 = vector.extract_strided_slice %208 {offsets = [0, 0], sizes = [1, 32], strides = [1, 1]} : vector<1x128xf32> to vector<1x32xf32>
    %210 = vector.extract_strided_slice %208 {offsets = [0, 32], sizes = [1, 32], strides = [1, 1]} : vector<1x128xf32> to vector<1x32xf32>
    %211 = vector.extract_strided_slice %208 {offsets = [0, 64], sizes = [1, 32], strides = [1, 1]} : vector<1x128xf32> to vector<1x32xf32>
    %cst_69 = arith.constant 2.000000e+00 : f32
    %212 = vector.broadcast %cst_69 : f32 to vector<1x32xf32>
    %213 = arith.mulf %212, %211 : vector<1x32xf32>
    %cst_70 = arith.constant 1.000000e+00 : f32
    %214 = vector.broadcast %cst_70 : f32 to vector<1x32xf32>
    %215 = arith.subf %213, %214 : vector<1x32xf32>
    %216 = vector.extract_strided_slice %208 {offsets = [0, 96], sizes = [1, 32], strides = [1, 1]} : vector<1x128xf32> to vector<1x32xf32>
    %217 = arith.mulf %210, %154 : vector<1x32xf32>
    %218 = arith.mulf %209, %215 : vector<1x32xf32>
    %219 = arith.addf %217, %218 : vector<1x32xf32>
    %220 = math.tanh %219 : vector<1x32xf32>
    %221 = arith.mulf %216, %220 : vector<1x32xf32>
    %222 = vector.extract_strided_slice %20 {offsets = [3, 0], sizes = [1, 128], strides = [1, 1]} : vector<8x128xf32> to vector<1x128xf32>
    %cst_71 = arith.constant dense<0.000000e+00> : vector<1x128xf32>
    %223 = tpu.matmul %177, %0, %cst_71 {dimension_numbers = #tpu.dot_dimension_numbers<[1], [0], [0], [1], [0, 0, 1, 1], [], []>} : vector<1x32xf32>, vector<32x128xf32>, vector<1x128xf32> -> vector<1x128xf32>
    %224 = arith.addf %222, %223 : vector<1x128xf32>
    %225 = arith.negf %224 : vector<1x128xf32>
    %226 = math.exp %225 : vector<1x128xf32>
    %cst_72 = arith.constant 1.000000e+00 : f32
    %227 = vector.broadcast %cst_72 : f32 to vector<1x128xf32>
    %228 = arith.addf %227, %226 : vector<1x128xf32>
    %229 = arith.divf %227, %228 : vector<1x128xf32>
    %230 = vector.extract_strided_slice %229 {offsets = [0, 0], sizes = [1, 32], strides = [1, 1]} : vector<1x128xf32> to vector<1x32xf32>
    %231 = vector.extract_strided_slice %229 {offsets = [0, 32], sizes = [1, 32], strides = [1, 1]} : vector<1x128xf32> to vector<1x32xf32>
    %232 = vector.extract_strided_slice %229 {offsets = [0, 64], sizes = [1, 32], strides = [1, 1]} : vector<1x128xf32> to vector<1x32xf32>
    %cst_73 = arith.constant 2.000000e+00 : f32
    %233 = vector.broadcast %cst_73 : f32 to vector<1x32xf32>
    %234 = arith.mulf %233, %232 : vector<1x32xf32>
    %cst_74 = arith.constant 1.000000e+00 : f32
    %235 = vector.broadcast %cst_74 : f32 to vector<1x32xf32>
    %236 = arith.subf %234, %235 : vector<1x32xf32>
    %237 = vector.extract_strided_slice %229 {offsets = [0, 96], sizes = [1, 32], strides = [1, 1]} : vector<1x128xf32> to vector<1x32xf32>
    %238 = arith.mulf %231, %175 : vector<1x32xf32>
    %239 = arith.mulf %230, %236 : vector<1x32xf32>
    %240 = arith.addf %238, %239 : vector<1x32xf32>
    %241 = math.tanh %240 : vector<1x32xf32>
    %242 = arith.mulf %237, %241 : vector<1x32xf32>
    %cst_75 = arith.constant dense<0.000000e+00> : vector<1x128xf32>
    %243 = tpu.matmul %242, %2, %cst_75 {dimension_numbers = #tpu.dot_dimension_numbers<[1], [0], [0], [1], [0, 0, 1, 1], [], []>} : vector<1x32xf32>, vector<32x128xf32>, vector<1x128xf32> -> vector<1x128xf32>
    %cst_76 = arith.constant dense<0.000000e+00> : vector<1x128xf32>
    %244 = tpu.matmul %199, %6, %cst_76 {dimension_numbers = #tpu.dot_dimension_numbers<[1], [0], [0], [1], [0, 0, 1, 1], [], []>} : vector<1x32xf32>, vector<32x128xf32>, vector<1x128xf32> -> vector<1x128xf32>
    %245 = arith.addf %243, %244 : vector<1x128xf32>
    %246 = arith.addf %245, %10 : vector<1x128xf32>
    %247 = arith.negf %246 : vector<1x128xf32>
    %248 = math.exp %247 : vector<1x128xf32>
    %cst_77 = arith.constant 1.000000e+00 : f32
    %249 = vector.broadcast %cst_77 : f32 to vector<1x128xf32>
    %250 = arith.addf %249, %248 : vector<1x128xf32>
    %251 = arith.divf %249, %250 : vector<1x128xf32>
    %252 = vector.extract_strided_slice %251 {offsets = [0, 0], sizes = [1, 32], strides = [1, 1]} : vector<1x128xf32> to vector<1x32xf32>
    %253 = vector.extract_strided_slice %251 {offsets = [0, 32], sizes = [1, 32], strides = [1, 1]} : vector<1x128xf32> to vector<1x32xf32>
    %254 = vector.extract_strided_slice %251 {offsets = [0, 64], sizes = [1, 32], strides = [1, 1]} : vector<1x128xf32> to vector<1x32xf32>
    %cst_78 = arith.constant 2.000000e+00 : f32
    %255 = vector.broadcast %cst_78 : f32 to vector<1x32xf32>
    %256 = arith.mulf %255, %254 : vector<1x32xf32>
    %cst_79 = arith.constant 1.000000e+00 : f32
    %257 = vector.broadcast %cst_79 : f32 to vector<1x32xf32>
    %258 = arith.subf %256, %257 : vector<1x32xf32>
    %259 = vector.extract_strided_slice %251 {offsets = [0, 96], sizes = [1, 32], strides = [1, 1]} : vector<1x128xf32> to vector<1x32xf32>
    %260 = arith.mulf %253, %197 : vector<1x32xf32>
    %261 = arith.mulf %252, %258 : vector<1x32xf32>
    %262 = arith.addf %260, %261 : vector<1x32xf32>
    %263 = math.tanh %262 : vector<1x32xf32>
    %264 = arith.mulf %259, %263 : vector<1x32xf32>
    %cst_80 = arith.constant dense<0.000000e+00> : vector<1x128xf32>
    %265 = tpu.matmul %264, %4, %cst_80 {dimension_numbers = #tpu.dot_dimension_numbers<[1], [0], [0], [1], [0, 0, 1, 1], [], []>} : vector<1x32xf32>, vector<32x128xf32>, vector<1x128xf32> -> vector<1x128xf32>
    %cst_81 = arith.constant dense<0.000000e+00> : vector<1x128xf32>
    %266 = tpu.matmul %221, %8, %cst_81 {dimension_numbers = #tpu.dot_dimension_numbers<[1], [0], [0], [1], [0, 0, 1, 1], [], []>} : vector<1x32xf32>, vector<32x128xf32>, vector<1x128xf32> -> vector<1x128xf32>
    %267 = arith.addf %265, %266 : vector<1x128xf32>
    %268 = arith.addf %267, %12 : vector<1x128xf32>
    %269 = arith.negf %268 : vector<1x128xf32>
    %270 = math.exp %269 : vector<1x128xf32>
    %cst_82 = arith.constant 1.000000e+00 : f32
    %271 = vector.broadcast %cst_82 : f32 to vector<1x128xf32>
    %272 = arith.addf %271, %270 : vector<1x128xf32>
    %273 = arith.divf %271, %272 : vector<1x128xf32>
    %274 = vector.extract_strided_slice %273 {offsets = [0, 0], sizes = [1, 32], strides = [1, 1]} : vector<1x128xf32> to vector<1x32xf32>
    %275 = vector.extract_strided_slice %273 {offsets = [0, 32], sizes = [1, 32], strides = [1, 1]} : vector<1x128xf32> to vector<1x32xf32>
    %276 = vector.extract_strided_slice %273 {offsets = [0, 64], sizes = [1, 32], strides = [1, 1]} : vector<1x128xf32> to vector<1x32xf32>
    %cst_83 = arith.constant 2.000000e+00 : f32
    %277 = vector.broadcast %cst_83 : f32 to vector<1x32xf32>
    %278 = arith.mulf %277, %276 : vector<1x32xf32>
    %cst_84 = arith.constant 1.000000e+00 : f32
    %279 = vector.broadcast %cst_84 : f32 to vector<1x32xf32>
    %280 = arith.subf %278, %279 : vector<1x32xf32>
    %281 = vector.extract_strided_slice %273 {offsets = [0, 96], sizes = [1, 32], strides = [1, 1]} : vector<1x128xf32> to vector<1x32xf32>
    %282 = arith.mulf %275, %219 : vector<1x32xf32>
    %283 = arith.mulf %274, %280 : vector<1x32xf32>
    %284 = arith.addf %282, %283 : vector<1x32xf32>
    %285 = math.tanh %284 : vector<1x32xf32>
    %286 = arith.mulf %281, %285 : vector<1x32xf32>
    %287 = vector.extract_strided_slice %20 {offsets = [4, 0], sizes = [1, 128], strides = [1, 1]} : vector<8x128xf32> to vector<1x128xf32>
    %cst_85 = arith.constant dense<0.000000e+00> : vector<1x128xf32>
    %288 = tpu.matmul %242, %0, %cst_85 {dimension_numbers = #tpu.dot_dimension_numbers<[1], [0], [0], [1], [0, 0, 1, 1], [], []>} : vector<1x32xf32>, vector<32x128xf32>, vector<1x128xf32> -> vector<1x128xf32>
    %289 = arith.addf %287, %288 : vector<1x128xf32>
    %290 = arith.negf %289 : vector<1x128xf32>
    %291 = math.exp %290 : vector<1x128xf32>
    %cst_86 = arith.constant 1.000000e+00 : f32
    %292 = vector.broadcast %cst_86 : f32 to vector<1x128xf32>
    %293 = arith.addf %292, %291 : vector<1x128xf32>
    %294 = arith.divf %292, %293 : vector<1x128xf32>
    %295 = vector.extract_strided_slice %294 {offsets = [0, 0], sizes = [1, 32], strides = [1, 1]} : vector<1x128xf32> to vector<1x32xf32>
    %296 = vector.extract_strided_slice %294 {offsets = [0, 32], sizes = [1, 32], strides = [1, 1]} : vector<1x128xf32> to vector<1x32xf32>
    %297 = vector.extract_strided_slice %294 {offsets = [0, 64], sizes = [1, 32], strides = [1, 1]} : vector<1x128xf32> to vector<1x32xf32>
    %cst_87 = arith.constant 2.000000e+00 : f32
    %298 = vector.broadcast %cst_87 : f32 to vector<1x32xf32>
    %299 = arith.mulf %298, %297 : vector<1x32xf32>
    %cst_88 = arith.constant 1.000000e+00 : f32
    %300 = vector.broadcast %cst_88 : f32 to vector<1x32xf32>
    %301 = arith.subf %299, %300 : vector<1x32xf32>
    %302 = vector.extract_strided_slice %294 {offsets = [0, 96], sizes = [1, 32], strides = [1, 1]} : vector<1x128xf32> to vector<1x32xf32>
    %303 = arith.mulf %296, %240 : vector<1x32xf32>
    %304 = arith.mulf %295, %301 : vector<1x32xf32>
    %305 = arith.addf %303, %304 : vector<1x32xf32>
    %306 = math.tanh %305 : vector<1x32xf32>
    %307 = arith.mulf %302, %306 : vector<1x32xf32>
    %cst_89 = arith.constant dense<0.000000e+00> : vector<1x128xf32>
    %308 = tpu.matmul %307, %2, %cst_89 {dimension_numbers = #tpu.dot_dimension_numbers<[1], [0], [0], [1], [0, 0, 1, 1], [], []>} : vector<1x32xf32>, vector<32x128xf32>, vector<1x128xf32> -> vector<1x128xf32>
    %cst_90 = arith.constant dense<0.000000e+00> : vector<1x128xf32>
    %309 = tpu.matmul %264, %6, %cst_90 {dimension_numbers = #tpu.dot_dimension_numbers<[1], [0], [0], [1], [0, 0, 1, 1], [], []>} : vector<1x32xf32>, vector<32x128xf32>, vector<1x128xf32> -> vector<1x128xf32>
    %310 = arith.addf %308, %309 : vector<1x128xf32>
    %311 = arith.addf %310, %10 : vector<1x128xf32>
    %312 = arith.negf %311 : vector<1x128xf32>
    %313 = math.exp %312 : vector<1x128xf32>
    %cst_91 = arith.constant 1.000000e+00 : f32
    %314 = vector.broadcast %cst_91 : f32 to vector<1x128xf32>
    %315 = arith.addf %314, %313 : vector<1x128xf32>
    %316 = arith.divf %314, %315 : vector<1x128xf32>
    %317 = vector.extract_strided_slice %316 {offsets = [0, 0], sizes = [1, 32], strides = [1, 1]} : vector<1x128xf32> to vector<1x32xf32>
    %318 = vector.extract_strided_slice %316 {offsets = [0, 32], sizes = [1, 32], strides = [1, 1]} : vector<1x128xf32> to vector<1x32xf32>
    %319 = vector.extract_strided_slice %316 {offsets = [0, 64], sizes = [1, 32], strides = [1, 1]} : vector<1x128xf32> to vector<1x32xf32>
    %cst_92 = arith.constant 2.000000e+00 : f32
    %320 = vector.broadcast %cst_92 : f32 to vector<1x32xf32>
    %321 = arith.mulf %320, %319 : vector<1x32xf32>
    %cst_93 = arith.constant 1.000000e+00 : f32
    %322 = vector.broadcast %cst_93 : f32 to vector<1x32xf32>
    %323 = arith.subf %321, %322 : vector<1x32xf32>
    %324 = vector.extract_strided_slice %316 {offsets = [0, 96], sizes = [1, 32], strides = [1, 1]} : vector<1x128xf32> to vector<1x32xf32>
    %325 = arith.mulf %318, %262 : vector<1x32xf32>
    %326 = arith.mulf %317, %323 : vector<1x32xf32>
    %327 = arith.addf %325, %326 : vector<1x32xf32>
    %328 = math.tanh %327 : vector<1x32xf32>
    %329 = arith.mulf %324, %328 : vector<1x32xf32>
    %cst_94 = arith.constant dense<0.000000e+00> : vector<1x128xf32>
    %330 = tpu.matmul %329, %4, %cst_94 {dimension_numbers = #tpu.dot_dimension_numbers<[1], [0], [0], [1], [0, 0, 1, 1], [], []>} : vector<1x32xf32>, vector<32x128xf32>, vector<1x128xf32> -> vector<1x128xf32>
    %cst_95 = arith.constant dense<0.000000e+00> : vector<1x128xf32>
    %331 = tpu.matmul %286, %8, %cst_95 {dimension_numbers = #tpu.dot_dimension_numbers<[1], [0], [0], [1], [0, 0, 1, 1], [], []>} : vector<1x32xf32>, vector<32x128xf32>, vector<1x128xf32> -> vector<1x128xf32>
    %332 = arith.addf %330, %331 : vector<1x128xf32>
    %333 = arith.addf %332, %12 : vector<1x128xf32>
    %334 = arith.negf %333 : vector<1x128xf32>
    %335 = math.exp %334 : vector<1x128xf32>
    %cst_96 = arith.constant 1.000000e+00 : f32
    %336 = vector.broadcast %cst_96 : f32 to vector<1x128xf32>
    %337 = arith.addf %336, %335 : vector<1x128xf32>
    %338 = arith.divf %336, %337 : vector<1x128xf32>
    %339 = vector.extract_strided_slice %338 {offsets = [0, 0], sizes = [1, 32], strides = [1, 1]} : vector<1x128xf32> to vector<1x32xf32>
    %340 = vector.extract_strided_slice %338 {offsets = [0, 32], sizes = [1, 32], strides = [1, 1]} : vector<1x128xf32> to vector<1x32xf32>
    %341 = vector.extract_strided_slice %338 {offsets = [0, 64], sizes = [1, 32], strides = [1, 1]} : vector<1x128xf32> to vector<1x32xf32>
    %cst_97 = arith.constant 2.000000e+00 : f32
    %342 = vector.broadcast %cst_97 : f32 to vector<1x32xf32>
    %343 = arith.mulf %342, %341 : vector<1x32xf32>
    %cst_98 = arith.constant 1.000000e+00 : f32
    %344 = vector.broadcast %cst_98 : f32 to vector<1x32xf32>
    %345 = arith.subf %343, %344 : vector<1x32xf32>
    %346 = vector.extract_strided_slice %338 {offsets = [0, 96], sizes = [1, 32], strides = [1, 1]} : vector<1x128xf32> to vector<1x32xf32>
    %347 = arith.mulf %340, %284 : vector<1x32xf32>
    %348 = arith.mulf %339, %345 : vector<1x32xf32>
    %349 = arith.addf %347, %348 : vector<1x32xf32>
    %350 = math.tanh %349 : vector<1x32xf32>
    %351 = arith.mulf %346, %350 : vector<1x32xf32>
    %352 = vector.extract_strided_slice %20 {offsets = [5, 0], sizes = [1, 128], strides = [1, 1]} : vector<8x128xf32> to vector<1x128xf32>
    %cst_99 = arith.constant dense<0.000000e+00> : vector<1x128xf32>
    %353 = tpu.matmul %307, %0, %cst_99 {dimension_numbers = #tpu.dot_dimension_numbers<[1], [0], [0], [1], [0, 0, 1, 1], [], []>} : vector<1x32xf32>, vector<32x128xf32>, vector<1x128xf32> -> vector<1x128xf32>
    %354 = arith.addf %352, %353 : vector<1x128xf32>
    %355 = arith.negf %354 : vector<1x128xf32>
    %356 = math.exp %355 : vector<1x128xf32>
    %cst_100 = arith.constant 1.000000e+00 : f32
    %357 = vector.broadcast %cst_100 : f32 to vector<1x128xf32>
    %358 = arith.addf %357, %356 : vector<1x128xf32>
    %359 = arith.divf %357, %358 : vector<1x128xf32>
    %360 = vector.extract_strided_slice %359 {offsets = [0, 0], sizes = [1, 32], strides = [1, 1]} : vector<1x128xf32> to vector<1x32xf32>
    %361 = vector.extract_strided_slice %359 {offsets = [0, 32], sizes = [1, 32], strides = [1, 1]} : vector<1x128xf32> to vector<1x32xf32>
    %362 = vector.extract_strided_slice %359 {offsets = [0, 64], sizes = [1, 32], strides = [1, 1]} : vector<1x128xf32> to vector<1x32xf32>
    %cst_101 = arith.constant 2.000000e+00 : f32
    %363 = vector.broadcast %cst_101 : f32 to vector<1x32xf32>
    %364 = arith.mulf %363, %362 : vector<1x32xf32>
    %cst_102 = arith.constant 1.000000e+00 : f32
    %365 = vector.broadcast %cst_102 : f32 to vector<1x32xf32>
    %366 = arith.subf %364, %365 : vector<1x32xf32>
    %367 = vector.extract_strided_slice %359 {offsets = [0, 96], sizes = [1, 32], strides = [1, 1]} : vector<1x128xf32> to vector<1x32xf32>
    %368 = arith.mulf %361, %305 : vector<1x32xf32>
    %369 = arith.mulf %360, %366 : vector<1x32xf32>
    %370 = arith.addf %368, %369 : vector<1x32xf32>
    %371 = math.tanh %370 : vector<1x32xf32>
    %372 = arith.mulf %367, %371 : vector<1x32xf32>
    %cst_103 = arith.constant dense<0.000000e+00> : vector<1x128xf32>
    %373 = tpu.matmul %372, %2, %cst_103 {dimension_numbers = #tpu.dot_dimension_numbers<[1], [0], [0], [1], [0, 0, 1, 1], [], []>} : vector<1x32xf32>, vector<32x128xf32>, vector<1x128xf32> -> vector<1x128xf32>
    %cst_104 = arith.constant dense<0.000000e+00> : vector<1x128xf32>
    %374 = tpu.matmul %329, %6, %cst_104 {dimension_numbers = #tpu.dot_dimension_numbers<[1], [0], [0], [1], [0, 0, 1, 1], [], []>} : vector<1x32xf32>, vector<32x128xf32>, vector<1x128xf32> -> vector<1x128xf32>
    %375 = arith.addf %373, %374 : vector<1x128xf32>
    %376 = arith.addf %375, %10 : vector<1x128xf32>
    %377 = arith.negf %376 : vector<1x128xf32>
    %378 = math.exp %377 : vector<1x128xf32>
    %cst_105 = arith.constant 1.000000e+00 : f32
    %379 = vector.broadcast %cst_105 : f32 to vector<1x128xf32>
    %380 = arith.addf %379, %378 : vector<1x128xf32>
    %381 = arith.divf %379, %380 : vector<1x128xf32>
    %382 = vector.extract_strided_slice %381 {offsets = [0, 0], sizes = [1, 32], strides = [1, 1]} : vector<1x128xf32> to vector<1x32xf32>
    %383 = vector.extract_strided_slice %381 {offsets = [0, 32], sizes = [1, 32], strides = [1, 1]} : vector<1x128xf32> to vector<1x32xf32>
    %384 = vector.extract_strided_slice %381 {offsets = [0, 64], sizes = [1, 32], strides = [1, 1]} : vector<1x128xf32> to vector<1x32xf32>
    %cst_106 = arith.constant 2.000000e+00 : f32
    %385 = vector.broadcast %cst_106 : f32 to vector<1x32xf32>
    %386 = arith.mulf %385, %384 : vector<1x32xf32>
    %cst_107 = arith.constant 1.000000e+00 : f32
    %387 = vector.broadcast %cst_107 : f32 to vector<1x32xf32>
    %388 = arith.subf %386, %387 : vector<1x32xf32>
    %389 = vector.extract_strided_slice %381 {offsets = [0, 96], sizes = [1, 32], strides = [1, 1]} : vector<1x128xf32> to vector<1x32xf32>
    %390 = arith.mulf %383, %327 : vector<1x32xf32>
    %391 = arith.mulf %382, %388 : vector<1x32xf32>
    %392 = arith.addf %390, %391 : vector<1x32xf32>
    %393 = math.tanh %392 : vector<1x32xf32>
    %394 = arith.mulf %389, %393 : vector<1x32xf32>
    %cst_108 = arith.constant dense<0.000000e+00> : vector<1x128xf32>
    %395 = tpu.matmul %394, %4, %cst_108 {dimension_numbers = #tpu.dot_dimension_numbers<[1], [0], [0], [1], [0, 0, 1, 1], [], []>} : vector<1x32xf32>, vector<32x128xf32>, vector<1x128xf32> -> vector<1x128xf32>
    %cst_109 = arith.constant dense<0.000000e+00> : vector<1x128xf32>
    %396 = tpu.matmul %351, %8, %cst_109 {dimension_numbers = #tpu.dot_dimension_numbers<[1], [0], [0], [1], [0, 0, 1, 1], [], []>} : vector<1x32xf32>, vector<32x128xf32>, vector<1x128xf32> -> vector<1x128xf32>
    %397 = arith.addf %395, %396 : vector<1x128xf32>
    %398 = arith.addf %397, %12 : vector<1x128xf32>
    %399 = arith.negf %398 : vector<1x128xf32>
    %400 = math.exp %399 : vector<1x128xf32>
    %cst_110 = arith.constant 1.000000e+00 : f32
    %401 = vector.broadcast %cst_110 : f32 to vector<1x128xf32>
    %402 = arith.addf %401, %400 : vector<1x128xf32>
    %403 = arith.divf %401, %402 : vector<1x128xf32>
    %404 = vector.extract_strided_slice %403 {offsets = [0, 0], sizes = [1, 32], strides = [1, 1]} : vector<1x128xf32> to vector<1x32xf32>
    %405 = vector.extract_strided_slice %403 {offsets = [0, 32], sizes = [1, 32], strides = [1, 1]} : vector<1x128xf32> to vector<1x32xf32>
    %406 = vector.extract_strided_slice %403 {offsets = [0, 64], sizes = [1, 32], strides = [1, 1]} : vector<1x128xf32> to vector<1x32xf32>
    %cst_111 = arith.constant 2.000000e+00 : f32
    %407 = vector.broadcast %cst_111 : f32 to vector<1x32xf32>
    %408 = arith.mulf %407, %406 : vector<1x32xf32>
    %cst_112 = arith.constant 1.000000e+00 : f32
    %409 = vector.broadcast %cst_112 : f32 to vector<1x32xf32>
    %410 = arith.subf %408, %409 : vector<1x32xf32>
    %411 = vector.extract_strided_slice %403 {offsets = [0, 96], sizes = [1, 32], strides = [1, 1]} : vector<1x128xf32> to vector<1x32xf32>
    %412 = arith.mulf %405, %349 : vector<1x32xf32>
    %413 = arith.mulf %404, %410 : vector<1x32xf32>
    %414 = arith.addf %412, %413 : vector<1x32xf32>
    %415 = math.tanh %414 : vector<1x32xf32>
    %416 = arith.mulf %411, %415 : vector<1x32xf32>
    %417 = vector.extract_strided_slice %20 {offsets = [6, 0], sizes = [1, 128], strides = [1, 1]} : vector<8x128xf32> to vector<1x128xf32>
    %cst_113 = arith.constant dense<0.000000e+00> : vector<1x128xf32>
    %418 = tpu.matmul %372, %0, %cst_113 {dimension_numbers = #tpu.dot_dimension_numbers<[1], [0], [0], [1], [0, 0, 1, 1], [], []>} : vector<1x32xf32>, vector<32x128xf32>, vector<1x128xf32> -> vector<1x128xf32>
    %419 = arith.addf %417, %418 : vector<1x128xf32>
    %420 = arith.negf %419 : vector<1x128xf32>
    %421 = math.exp %420 : vector<1x128xf32>
    %cst_114 = arith.constant 1.000000e+00 : f32
    %422 = vector.broadcast %cst_114 : f32 to vector<1x128xf32>
    %423 = arith.addf %422, %421 : vector<1x128xf32>
    %424 = arith.divf %422, %423 : vector<1x128xf32>
    %425 = vector.extract_strided_slice %424 {offsets = [0, 0], sizes = [1, 32], strides = [1, 1]} : vector<1x128xf32> to vector<1x32xf32>
    %426 = vector.extract_strided_slice %424 {offsets = [0, 32], sizes = [1, 32], strides = [1, 1]} : vector<1x128xf32> to vector<1x32xf32>
    %427 = vector.extract_strided_slice %424 {offsets = [0, 64], sizes = [1, 32], strides = [1, 1]} : vector<1x128xf32> to vector<1x32xf32>
    %cst_115 = arith.constant 2.000000e+00 : f32
    %428 = vector.broadcast %cst_115 : f32 to vector<1x32xf32>
    %429 = arith.mulf %428, %427 : vector<1x32xf32>
    %cst_116 = arith.constant 1.000000e+00 : f32
    %430 = vector.broadcast %cst_116 : f32 to vector<1x32xf32>
    %431 = arith.subf %429, %430 : vector<1x32xf32>
    %432 = vector.extract_strided_slice %424 {offsets = [0, 96], sizes = [1, 32], strides = [1, 1]} : vector<1x128xf32> to vector<1x32xf32>
    %433 = arith.mulf %426, %370 : vector<1x32xf32>
    %434 = arith.mulf %425, %431 : vector<1x32xf32>
    %435 = arith.addf %433, %434 : vector<1x32xf32>
    %436 = math.tanh %435 : vector<1x32xf32>
    %437 = arith.mulf %432, %436 : vector<1x32xf32>
    %cst_117 = arith.constant dense<0.000000e+00> : vector<1x128xf32>
    %438 = tpu.matmul %437, %2, %cst_117 {dimension_numbers = #tpu.dot_dimension_numbers<[1], [0], [0], [1], [0, 0, 1, 1], [], []>} : vector<1x32xf32>, vector<32x128xf32>, vector<1x128xf32> -> vector<1x128xf32>
    %cst_118 = arith.constant dense<0.000000e+00> : vector<1x128xf32>
    %439 = tpu.matmul %394, %6, %cst_118 {dimension_numbers = #tpu.dot_dimension_numbers<[1], [0], [0], [1], [0, 0, 1, 1], [], []>} : vector<1x32xf32>, vector<32x128xf32>, vector<1x128xf32> -> vector<1x128xf32>
    %440 = arith.addf %438, %439 : vector<1x128xf32>
    %441 = arith.addf %440, %10 : vector<1x128xf32>
    %442 = arith.negf %441 : vector<1x128xf32>
    %443 = math.exp %442 : vector<1x128xf32>
    %cst_119 = arith.constant 1.000000e+00 : f32
    %444 = vector.broadcast %cst_119 : f32 to vector<1x128xf32>
    %445 = arith.addf %444, %443 : vector<1x128xf32>
    %446 = arith.divf %444, %445 : vector<1x128xf32>
    %447 = vector.extract_strided_slice %446 {offsets = [0, 0], sizes = [1, 32], strides = [1, 1]} : vector<1x128xf32> to vector<1x32xf32>
    %448 = vector.extract_strided_slice %446 {offsets = [0, 32], sizes = [1, 32], strides = [1, 1]} : vector<1x128xf32> to vector<1x32xf32>
    %449 = vector.extract_strided_slice %446 {offsets = [0, 64], sizes = [1, 32], strides = [1, 1]} : vector<1x128xf32> to vector<1x32xf32>
    %cst_120 = arith.constant 2.000000e+00 : f32
    %450 = vector.broadcast %cst_120 : f32 to vector<1x32xf32>
    %451 = arith.mulf %450, %449 : vector<1x32xf32>
    %cst_121 = arith.constant 1.000000e+00 : f32
    %452 = vector.broadcast %cst_121 : f32 to vector<1x32xf32>
    %453 = arith.subf %451, %452 : vector<1x32xf32>
    %454 = vector.extract_strided_slice %446 {offsets = [0, 96], sizes = [1, 32], strides = [1, 1]} : vector<1x128xf32> to vector<1x32xf32>
    %455 = arith.mulf %448, %392 : vector<1x32xf32>
    %456 = arith.mulf %447, %453 : vector<1x32xf32>
    %457 = arith.addf %455, %456 : vector<1x32xf32>
    %458 = math.tanh %457 : vector<1x32xf32>
    %459 = arith.mulf %454, %458 : vector<1x32xf32>
    %cst_122 = arith.constant dense<0.000000e+00> : vector<1x128xf32>
    %460 = tpu.matmul %459, %4, %cst_122 {dimension_numbers = #tpu.dot_dimension_numbers<[1], [0], [0], [1], [0, 0, 1, 1], [], []>} : vector<1x32xf32>, vector<32x128xf32>, vector<1x128xf32> -> vector<1x128xf32>
    %cst_123 = arith.constant dense<0.000000e+00> : vector<1x128xf32>
    %461 = tpu.matmul %416, %8, %cst_123 {dimension_numbers = #tpu.dot_dimension_numbers<[1], [0], [0], [1], [0, 0, 1, 1], [], []>} : vector<1x32xf32>, vector<32x128xf32>, vector<1x128xf32> -> vector<1x128xf32>
    %462 = arith.addf %460, %461 : vector<1x128xf32>
    %463 = arith.addf %462, %12 : vector<1x128xf32>
    %464 = arith.negf %463 : vector<1x128xf32>
    %465 = math.exp %464 : vector<1x128xf32>
    %cst_124 = arith.constant 1.000000e+00 : f32
    %466 = vector.broadcast %cst_124 : f32 to vector<1x128xf32>
    %467 = arith.addf %466, %465 : vector<1x128xf32>
    %468 = arith.divf %466, %467 : vector<1x128xf32>
    %469 = vector.extract_strided_slice %468 {offsets = [0, 0], sizes = [1, 32], strides = [1, 1]} : vector<1x128xf32> to vector<1x32xf32>
    %470 = vector.extract_strided_slice %468 {offsets = [0, 32], sizes = [1, 32], strides = [1, 1]} : vector<1x128xf32> to vector<1x32xf32>
    %471 = vector.extract_strided_slice %468 {offsets = [0, 64], sizes = [1, 32], strides = [1, 1]} : vector<1x128xf32> to vector<1x32xf32>
    %cst_125 = arith.constant 2.000000e+00 : f32
    %472 = vector.broadcast %cst_125 : f32 to vector<1x32xf32>
    %473 = arith.mulf %472, %471 : vector<1x32xf32>
    %cst_126 = arith.constant 1.000000e+00 : f32
    %474 = vector.broadcast %cst_126 : f32 to vector<1x32xf32>
    %475 = arith.subf %473, %474 : vector<1x32xf32>
    %476 = vector.extract_strided_slice %468 {offsets = [0, 96], sizes = [1, 32], strides = [1, 1]} : vector<1x128xf32> to vector<1x32xf32>
    %477 = arith.mulf %470, %414 : vector<1x32xf32>
    %478 = arith.mulf %469, %475 : vector<1x32xf32>
    %479 = arith.addf %477, %478 : vector<1x32xf32>
    %480 = math.tanh %479 : vector<1x32xf32>
    %481 = arith.mulf %476, %480 : vector<1x32xf32>
    %482 = vector.extract_strided_slice %20 {offsets = [7, 0], sizes = [1, 128], strides = [1, 1]} : vector<8x128xf32> to vector<1x128xf32>
    %cst_127 = arith.constant dense<0.000000e+00> : vector<1x128xf32>
    %483 = tpu.matmul %437, %0, %cst_127 {dimension_numbers = #tpu.dot_dimension_numbers<[1], [0], [0], [1], [0, 0, 1, 1], [], []>} : vector<1x32xf32>, vector<32x128xf32>, vector<1x128xf32> -> vector<1x128xf32>
    %484 = arith.addf %482, %483 : vector<1x128xf32>
    %485 = arith.negf %484 : vector<1x128xf32>
    %486 = math.exp %485 : vector<1x128xf32>
    %cst_128 = arith.constant 1.000000e+00 : f32
    %487 = vector.broadcast %cst_128 : f32 to vector<1x128xf32>
    %488 = arith.addf %487, %486 : vector<1x128xf32>
    %489 = arith.divf %487, %488 : vector<1x128xf32>
    %490 = vector.extract_strided_slice %489 {offsets = [0, 0], sizes = [1, 32], strides = [1, 1]} : vector<1x128xf32> to vector<1x32xf32>
    %491 = vector.extract_strided_slice %489 {offsets = [0, 32], sizes = [1, 32], strides = [1, 1]} : vector<1x128xf32> to vector<1x32xf32>
    %492 = vector.extract_strided_slice %489 {offsets = [0, 64], sizes = [1, 32], strides = [1, 1]} : vector<1x128xf32> to vector<1x32xf32>
    %cst_129 = arith.constant 2.000000e+00 : f32
    %493 = vector.broadcast %cst_129 : f32 to vector<1x32xf32>
    %494 = arith.mulf %493, %492 : vector<1x32xf32>
    %cst_130 = arith.constant 1.000000e+00 : f32
    %495 = vector.broadcast %cst_130 : f32 to vector<1x32xf32>
    %496 = arith.subf %494, %495 : vector<1x32xf32>
    %497 = vector.extract_strided_slice %489 {offsets = [0, 96], sizes = [1, 32], strides = [1, 1]} : vector<1x128xf32> to vector<1x32xf32>
    %498 = arith.mulf %491, %435 : vector<1x32xf32>
    %499 = arith.mulf %490, %496 : vector<1x32xf32>
    %500 = arith.addf %498, %499 : vector<1x32xf32>
    %501 = math.tanh %500 : vector<1x32xf32>
    %502 = arith.mulf %497, %501 : vector<1x32xf32>
    %cst_131 = arith.constant dense<0.000000e+00> : vector<1x128xf32>
    %503 = tpu.matmul %502, %2, %cst_131 {dimension_numbers = #tpu.dot_dimension_numbers<[1], [0], [0], [1], [0, 0, 1, 1], [], []>} : vector<1x32xf32>, vector<32x128xf32>, vector<1x128xf32> -> vector<1x128xf32>
    %cst_132 = arith.constant dense<0.000000e+00> : vector<1x128xf32>
    %504 = tpu.matmul %459, %6, %cst_132 {dimension_numbers = #tpu.dot_dimension_numbers<[1], [0], [0], [1], [0, 0, 1, 1], [], []>} : vector<1x32xf32>, vector<32x128xf32>, vector<1x128xf32> -> vector<1x128xf32>
    %505 = arith.addf %503, %504 : vector<1x128xf32>
    %506 = arith.addf %505, %10 : vector<1x128xf32>
    %507 = arith.negf %506 : vector<1x128xf32>
    %508 = math.exp %507 : vector<1x128xf32>
    %cst_133 = arith.constant 1.000000e+00 : f32
    %509 = vector.broadcast %cst_133 : f32 to vector<1x128xf32>
    %510 = arith.addf %509, %508 : vector<1x128xf32>
    %511 = arith.divf %509, %510 : vector<1x128xf32>
    %512 = vector.extract_strided_slice %511 {offsets = [0, 0], sizes = [1, 32], strides = [1, 1]} : vector<1x128xf32> to vector<1x32xf32>
    %513 = vector.extract_strided_slice %511 {offsets = [0, 32], sizes = [1, 32], strides = [1, 1]} : vector<1x128xf32> to vector<1x32xf32>
    %514 = vector.extract_strided_slice %511 {offsets = [0, 64], sizes = [1, 32], strides = [1, 1]} : vector<1x128xf32> to vector<1x32xf32>
    %cst_134 = arith.constant 2.000000e+00 : f32
    %515 = vector.broadcast %cst_134 : f32 to vector<1x32xf32>
    %516 = arith.mulf %515, %514 : vector<1x32xf32>
    %cst_135 = arith.constant 1.000000e+00 : f32
    %517 = vector.broadcast %cst_135 : f32 to vector<1x32xf32>
    %518 = arith.subf %516, %517 : vector<1x32xf32>
    %519 = vector.extract_strided_slice %511 {offsets = [0, 96], sizes = [1, 32], strides = [1, 1]} : vector<1x128xf32> to vector<1x32xf32>
    %520 = arith.mulf %513, %457 : vector<1x32xf32>
    %521 = arith.mulf %512, %518 : vector<1x32xf32>
    %522 = arith.addf %520, %521 : vector<1x32xf32>
    %523 = math.tanh %522 : vector<1x32xf32>
    %524 = arith.mulf %519, %523 : vector<1x32xf32>
    %cst_136 = arith.constant dense<0.000000e+00> : vector<1x128xf32>
    %525 = tpu.matmul %524, %4, %cst_136 {dimension_numbers = #tpu.dot_dimension_numbers<[1], [0], [0], [1], [0, 0, 1, 1], [], []>} : vector<1x32xf32>, vector<32x128xf32>, vector<1x128xf32> -> vector<1x128xf32>
    %cst_137 = arith.constant dense<0.000000e+00> : vector<1x128xf32>
    %526 = tpu.matmul %481, %8, %cst_137 {dimension_numbers = #tpu.dot_dimension_numbers<[1], [0], [0], [1], [0, 0, 1, 1], [], []>} : vector<1x32xf32>, vector<32x128xf32>, vector<1x128xf32> -> vector<1x128xf32>
    %527 = arith.addf %525, %526 : vector<1x128xf32>
    %528 = arith.addf %527, %12 : vector<1x128xf32>
    %529 = arith.negf %528 : vector<1x128xf32>
    %530 = math.exp %529 : vector<1x128xf32>
    %cst_138 = arith.constant 1.000000e+00 : f32
    %531 = vector.broadcast %cst_138 : f32 to vector<1x128xf32>
    %532 = arith.addf %531, %530 : vector<1x128xf32>
    %533 = arith.divf %531, %532 : vector<1x128xf32>
    %534 = vector.extract_strided_slice %533 {offsets = [0, 0], sizes = [1, 32], strides = [1, 1]} : vector<1x128xf32> to vector<1x32xf32>
    %535 = vector.extract_strided_slice %533 {offsets = [0, 32], sizes = [1, 32], strides = [1, 1]} : vector<1x128xf32> to vector<1x32xf32>
    %536 = vector.extract_strided_slice %533 {offsets = [0, 64], sizes = [1, 32], strides = [1, 1]} : vector<1x128xf32> to vector<1x32xf32>
    %cst_139 = arith.constant 2.000000e+00 : f32
    %537 = vector.broadcast %cst_139 : f32 to vector<1x32xf32>
    %538 = arith.mulf %537, %536 : vector<1x32xf32>
    %cst_140 = arith.constant 1.000000e+00 : f32
    %539 = vector.broadcast %cst_140 : f32 to vector<1x32xf32>
    %540 = arith.subf %538, %539 : vector<1x32xf32>
    %541 = vector.extract_strided_slice %533 {offsets = [0, 96], sizes = [1, 32], strides = [1, 1]} : vector<1x128xf32> to vector<1x32xf32>
    %542 = arith.mulf %535, %479 : vector<1x32xf32>
    %543 = arith.mulf %534, %540 : vector<1x32xf32>
    %544 = arith.addf %542, %543 : vector<1x32xf32>
    %545 = math.tanh %544 : vector<1x32xf32>
    %546 = arith.mulf %541, %545 : vector<1x32xf32>
    %c0_141 = arith.constant 0 : index
    %c0_142 = arith.constant 0 : index
    %547 = vector.load %arg7[%c0_141, %c0_142] : memref<1x32xf32, #tpu.memory_space<vmem>>, vector<1x32xf32>
    %548 = arith.mulf %546, %547 : vector<1x32xf32>
    %cst_143 = arith.constant dense<0.000000e+00> : vector<1xf32>
    %549 = vector.multi_reduction <add>, %548, %cst_143 [1] : vector<1x32xf32> to vector<1xf32>
    %550 = vector.shape_cast %549 : vector<1xf32> to vector<1x1xf32>
    %c0_144 = arith.constant 0 : index
    %c0_145 = arith.constant 0 : index
    %551 = vector.load %arg8[%c0_144, %c0_145] : memref<1x1xf32, #tpu.memory_space<vmem>>, vector<1x1xf32>
    %552 = arith.addf %550, %551 : vector<1x1xf32>
    %c0_146 = arith.constant 0 : index
    %c0_147 = arith.constant 0 : index
    %553 = vector.load %arg9[%c0_146, %c0_147] : memref<1x1xf32, #tpu.memory_space<vmem>>, vector<1x1xf32>
    tpu.vector_store %arg9[%c0_146, %c0_147], %552 {strides = array<i32>} : memref<1x1xf32, #tpu.memory_space<vmem>>, vector<1x1xf32>,
    return
  }
}

</mosaic_0001>

<llo_original>
// kernel: tpu_custom_call.1
$region0: #{tpu_custom_call.1}
  #allocation0 [shape = 'u32[]', space=smem, size = 0x4, offset = 0x4, fixed_abs, tag = 'smem constant byte address 0x4 - core index']
  #allocation1 [shape = 'u32[72,128]{1,0:T(1,128)}', space=vmem, size = 0x9000, scoped, tag = 'internal scratch']
  #allocation2 [shape = 'f32[1,1]{1,0:T(1,128)S(1)}', space=vmem, size = 0x200, scoped, tag = 'scoped memory for tpu_custom_call.1']
  %s0 = inlined_call_operand.vmem [shape: f32[8,1], index: 0, kind: input, shape index: {}]
  %s1 = inlined_call_operand.vmem [shape: f32[1,128], index: 1, kind: input, shape index: {}]
  %s2 = inlined_call_operand.vmem [shape: f32[1,128], index: 2, kind: input, shape index: {}]
  %s3 = inlined_call_operand.hbm [shape: f32[32,128], index: 3, kind: input, shape index: {}]
  %s4 = inlined_call_operand.hbm [shape: f32[2,32,128], index: 4, kind: input, shape index: {}]
  %s5 = inlined_call_operand.hbm [shape: f32[2,32,128], index: 5, kind: input, shape index: {}]
  %s6 = inlined_call_operand.vmem [shape: f32[2,1,128], index: 6, kind: input, shape index: {}]
  %s7 = inlined_call_operand.vmem [shape: f32[1,32], index: 7, kind: input, shape index: {}]
  %s8 = inlined_call_operand.<no memory space> [shape: f32[1,1], index: 8, kind: input, shape index: {}]
  %s9 = inlined_call_operand.hbm [shape: f32[1,1], index: 9, kind: output, shape index: {}]
  %s10 = sld [smem:[#allocation0]]
  $region58: #{tpu_custom_call.1} parent=0
    _
  %s12 = ssub.s32 1, %s10
  %s13 = scalar_select 0, %s12, %s10
  %v14 = vstv %s8
  %15 = vst [vmem:[#allocation2] sm:$0x1] %v14
  $region1: #{tpu_custom_call.1} parent=0
    #allocation3 [shape = 'u8[16384]{0}', space=vmem, size = 0x4000, scoped, tag = 'input window, operand 3, single buffered']
    #allocation4 [shape = 's32[1]{0}', space=sflag, size = 0x4, scoped, tag = 'scoped memory for tpu_custom_call.1']
    #allocation5 [shape = 's32[1]{0}', space=sflag, size = 0x4, scoped, tag = 'scoped memory for tpu_custom_call.1']
    #allocation6 [shape = 'u8[32768]{0}', space=vmem, size = 0x8000, scoped, tag = 'input window, operand 4, single buffered']
    #allocation7 [shape = 's32[1]{0}', space=sflag, size = 0x4, scoped, tag = 'scoped memory for tpu_custom_call.1']
    #allocation8 [shape = 'u8[32768]{0}', space=vmem, size = 0x8000, scoped, tag = 'input window, operand 5, single buffered']
    #allocation9 [shape = 'u8[512]{0}', space=vmem, size = 0x400, scoped, tag = 'output window, operand 0, single buffered']
    %16 = vsyncpa [#allocation4], 0
    %17 = vsyncpa [#allocation7], 0
    %18 = vsyncpa [#allocation5], 0
    // Predicated region
    $region2: #{tpu_custom_call.1} parent=1 // pred_check
      _
    $region3: #{tpu_custom_call.1} parent=1 // pred_check_branch
      %20 = sbr.rel (0) target = $region5
    $region4: #{tpu_custom_call.1} parent=1 // pred_region
      _
    $region5: #{tpu_custom_call.1} parent=1 // pred_fallthru
      _
    // Predicated region
    $region6: #{tpu_custom_call.1} parent=1 // pred_check
      _
    $region7: #{tpu_custom_call.1} parent=1 // pred_check_branch
      %22 = sbr.rel (0) target = $region9
    $region8: #{tpu_custom_call.1} parent=1 // pred_region
      _
    $region9: #{tpu_custom_call.1} parent=1 // pred_fallthru
      _
    // Predicated region
    $region10: #{tpu_custom_call.1} parent=1 // pred_check
      _
    $region11: #{tpu_custom_call.1} parent=1 // pred_check_branch
      %24 = sbr.rel (0) target = $region13
    $region12: #{tpu_custom_call.1} parent=1 // pred_region
      _
    $region13: #{tpu_custom_call.1} parent=1 // pred_fallthru
      _
    // Predicated region
    $region14: #{tpu_custom_call.1} parent=1 // pred_check
      _
    $region15: #{tpu_custom_call.1} parent=1 // pred_check_branch
      %26 = sbr.rel (0) target = $region17
    $region16: #{tpu_custom_call.1} parent=1 // pred_region
      %28 = vsyncadd [#allocation4], 0
      %s29 = sshll.u32 %s3, 4
      %s30 = int_to_ptr.hbm [resolvable:$true] %s29
      %s31 = sshll.u32 [#allocation3], 4
      %s32 = int_to_ptr.vmem [resolvable:$true] %s31
      %37 = dma.hbm_to_vmem [thread:$0]  %s30, 512, %s32, [#allocation4], 128, 128, 8
    $region17: #{tpu_custom_call.1} parent=1 // pred_fallthru
      _
    // Predicated region
    $region18: #{tpu_custom_call.1} parent=1 // pred_check
      _
    $region19: #{tpu_custom_call.1} parent=1 // pred_check_branch
      %39 = sbr.rel (0) target = $region21
    $region20: #{tpu_custom_call.1} parent=1 // pred_region
      %41 = vsyncadd [#allocation7], 0
      %s42 = sshll.u32 %s4, 4
      %s43 = int_to_ptr.hbm [resolvable:$true] %s42
      %s44 = sshll.u32 [#allocation6], 4
      %s45 = int_to_ptr.vmem [resolvable:$true] %s44
      %50 = dma.hbm_to_vmem [thread:$0]  %s43, 1024, %s45, [#allocation7], 128, 128, 8
    $region21: #{tpu_custom_call.1} parent=1 // pred_fallthru
      _
    // Predicated region
    $region22: #{tpu_custom_call.1} parent=1 // pred_check
      _
    $region23: #{tpu_custom_call.1} parent=1 // pred_check_branch
      %52 = sbr.rel (0) target = $region25
    $region24: #{tpu_custom_call.1} parent=1 // pred_region
      %54 = vsyncadd [#allocation7], 0
      %s55 = sshll.u32 %s5, 4
      %s56 = int_to_ptr.hbm [resolvable:$true] %s55
      %s57 = sshll.u32 [#allocation8], 4
      %s58 = int_to_ptr.vmem [resolvable:$true] %s57
      %63 = dma.hbm_to_vmem [thread:$0]  %s56, 1024, %s58, [#allocation7], 128, 128, 8
    $region25: #{tpu_custom_call.1} parent=1 // pred_fallthru
      _
    // Predicated region
    $region26: #{tpu_custom_call.1} parent=1 // pred_check
      _
    $region27: #{tpu_custom_call.1} parent=1 // pred_check_branch
      %65 = sbr.rel (0) target = $region29
    $region28: #{tpu_custom_call.1} parent=1 // pred_region
      _
    $region29: #{tpu_custom_call.1} parent=1 // pred_fallthru
      _
    // Predicated region
    $region30: #{tpu_custom_call.1} parent=1 // pred_check
      _
    $region31: #{tpu_custom_call.1} parent=1 // pred_check_branch
      %67 = sbr.rel (0) target = $region33
    $region32: #{tpu_custom_call.1} parent=1 // pred_region
      _
    $region33: #{tpu_custom_call.1} parent=1 // pred_fallthru
      _
    // Predicated region
    $region34: #{tpu_custom_call.1} parent=1 // pred_check
      _
    $region35: #{tpu_custom_call.1} parent=1 // pred_check_branch
      %69 = sbr.rel (0) target = $region37
    $region36: #{tpu_custom_call.1} parent=1 // pred_region
      _
    $region37: #{tpu_custom_call.1} parent=1 // pred_fallthru
      _
    // Predicated region
    $region38: #{tpu_custom_call.1} parent=1 // pred_check
      _
    $region39: #{tpu_custom_call.1} parent=1 // pred_check_branch
      %71 = sbr.rel (0) target = $region41
    $region40: #{tpu_custom_call.1} parent=1 // pred_region
      %73 = dma.done [#allocation4], 512
    $region41: #{tpu_custom_call.1} parent=1 // pred_fallthru
      _
    // Predicated region
    $region42: #{tpu_custom_call.1} parent=1 // pred_check
      _
    $region43: #{tpu_custom_call.1} parent=1 // pred_check_branch
      %75 = sbr.rel (0) target = $region45
    $region44: #{tpu_custom_call.1} parent=1 // pred_region
      %77 = dma.done [#allocation7], 1024
    $region45: #{tpu_custom_call.1} parent=1 // pred_fallthru
      _
    // Predicated region
    $region46: #{tpu_custom_call.1} parent=1 // pred_check
      _
    $region47: #{tpu_custom_call.1} parent=1 // pred_check_branch
      %79 = sbr.rel (0) target = $region49
    $region48: #{tpu_custom_call.1} parent=1 // pred_region
      %81 = dma.done [#allocation7], 1024
    $region49: #{tpu_custom_call.1} parent=1 // pred_fallthru
      _
    %v82 = vld [vmem:[#allocation3] sm:$0xff]
    %v83 = vld [vmem:[#allocation3 + $0x8] sm:$0xff]
    %v84 = vld [vmem:[#allocation3 + $0x10] sm:$0xff]
    %v85 = vld [vmem:[#allocation3 + $0x18] sm:$0xff]
    %v86 = vld [vmem:[#allocation6] sm:$0xff]
    %v87 = vld [vmem:[#allocation6 + $0x8] sm:$0xff]
    %v88 = vld [vmem:[#allocation6 + $0x10] sm:$0xff]
    %v89 = vld [vmem:[#allocation6 + $0x18] sm:$0xff]
    %s90 = scalar_lea.vmem [#allocation6], 32
    %v91 = vld [vmem:[%s90] sm:$0xff]
    %v92 = vld [vmem:[%s90 + $0x8] sm:$0xff]
    %v93 = vld [vmem:[%s90 + $0x10] sm:$0xff]
    %v94 = vld [vmem:[%s90 + $0x18] sm:$0xff]
    %v95 = vld [vmem:[#allocation8] sm:$0xff]
    %v96 = vld [vmem:[#allocation8 + $0x8] sm:$0xff]
    %v97 = vld [vmem:[#allocation8 + $0x10] sm:$0xff]
    %v98 = vld [vmem:[#allocation8 + $0x18] sm:$0xff]
    %s99 = scalar_lea.vmem [#allocation8], 32
    %v100 = vld [vmem:[%s99] sm:$0xff]
    %v101 = vld [vmem:[%s99 + $0x8] sm:$0xff]
    %v102 = vld [vmem:[%s99 + $0x10] sm:$0xff]
    %v103 = vld [vmem:[%s99 + $0x18] sm:$0xff]
    %v104 = vld [vmem:[%s6] sm:$0x1]
    %s105 = scalar_lea.vmem %s6, 1
    %v106 = vld [vmem:[%s105] sm:$0x1]
    %v107 = vld [vmem:[%s0] sm:$0xff]
    %v108 = vld [vmem:[%s1] sm:$0x1]
    %110 = vset.pattern.permute.xlu0 0
    %111 = vperm.xlu0 %110, %v107
    %v112 = vpop.permute.xlu0 %111
    %v115 = vperm.slane %v108, 0
    %v117 = vmul.f32 %v112, %v115
    %v118 = vld [vmem:[%s2] sm:$0x1]
    %v120 = vperm.slane %v118, 0
    %v122 = vadd.f32 %v117, %v120
    %vm123 = vcmask 261120
    %v125 = vsel %vm123, 0.0, 0
    %127 = vmatpush.msra.mxu0 0.0
    %128 = vmatpush.msra.mxu0 0.0
    %129 = vmatpush.msra.mxu0 0.0
    %130 = vmatpush.msra.mxu0 0.0
    %131 = vmatpush.msra.mxu0 0.0
    %132 = vmatpush.msra.mxu0 0.0
    %133 = vmatpush.msra.mxu0 0.0
    %134 = vmatpush.msra.mxu0 0.0
    %135 = vmatpush.msra.mxu0 0.0
    %136 = vmatpush.msra.mxu0 0.0
    %137 = vmatpush.msra.mxu0 0.0
    %138 = vmatpush.msra.mxu0 0.0
    %139 = vmatpush.msra.mxu0 %v85
    %140 = vmatpush.msra.mxu0 %v84
    %141 = vmatpush.msra.mxu0 %v83
    %142 = vmatpush.msra.mxu0 %v82
    %143 = vmatmul.f32.gmra.mxu0 %v125
    %v144 = vpop.f32.mrf.mxu0
    %v145 = vadd.f32 0.0, %v144
    %146 = vdwg.mxu0
    %v147 = vadd.f32 %v122, %v145
    %v148 = vxor.u32 %v147, 2147483648
    %v149 = vmul.f32 %v148, 1.442695
    %v150 = vpow.pop %v149
    %v151 = vadd.f32 %v150, 1.0
    %v152 = vrcp.pop %v151
    %v153 = vmul.f32 %v151, %v152
    %v154 = vsub.f32 1.0, %v153
    %v155 = vmul.f32 %v152, %v154
    %v156 = vadd.f32 %v152, %v155
    %vm157 = vweird.f32 %v151
    %vm158 = vweird.f32 %v152
    %vm159 = vmor %vm157, %vm158
    %v160 = vsel %vm159, %v152, %v156
    %v161 = vand.u32 2147483647, %v151
    %vm162 = vcmp.eq.f32.partialorder %v161, 8.507059e+37
    %v163 = vand.u32 %v151, 2147483648
    %v164 = vor.u32 1.1754944e-38, %v163
    %v165 = vsel %vm162, %v164, %v160
    %v166 = vmul.f32 1.0, %v165
    %v167 = vmul.f32 %v166, 2.0
    %v168 = vsub.f32 %v167, 1.0
    %v169 = vmul.f32 %v166, 0.0
    %171 = vrot.lane.b32.xlu0 %v168, 64
    %v172 = vpop.permute.xlu0 %171
    %v174 = vmul.f32 %v166, %v172
    %176 = vrot.lane.b32.xlu0 %v174, 32
    %v177 = vpop.permute.xlu0 %176
    %v179 = vadd.f32 %v169, %v177
    %v180 = vtanh.pop %v179
    %182 = vrot.lane.b32.xlu0 %v180, 64
    %v183 = vpop.permute.xlu0 %182
    %v185 = vmul.f32 %v166, %v183
    %186 = vmatpush.msra.mxu0 0.0
    %187 = vmatpush.msra.mxu0 0.0
    %188 = vmatpush.msra.mxu0 0.0
    %189 = vmatpush.msra.mxu0 0.0
    %190 = vmatpush.msra.mxu0 0.0
    %191 = vmatpush.msra.mxu0 0.0
    %192 = vmatpush.msra.mxu0 0.0
    %193 = vmatpush.msra.mxu0 0.0
    %194 = vmatpush.msra.mxu0 0.0
    %195 = vmatpush.msra.mxu0 0.0
    %196 = vmatpush.msra.mxu0 0.0
    %197 = vmatpush.msra.mxu0 0.0
    %198 = vmatpush.msra.mxu0 %v98
    %199 = vmatpush.msra.mxu0 %v97
    %200 = vmatpush.msra.mxu0 %v96
    %201 = vmatpush.msra.mxu0 %v95
    %202 = vmatmul.f32.gmra.mxu0 %v125
    %v203 = vpop.f32.mrf.mxu0
    %v204 = vadd.f32 0.0, %v203
    %205 = vdwg.mxu0
    %207 = vrot.lane.b32.xlu0 %v185, 32
    %v208 = vpop.permute.xlu0 %207
    %v209 = vsel %vm123, %v208, 0
    %211 = vmatpush.msra.mxu0 0.0
    %212 = vmatpush.msra.mxu0 0.0
    %213 = vmatpush.msra.mxu0 0.0
    %214 = vmatpush.msra.mxu0 0.0
    %215 = vmatpush.msra.mxu0 0.0
    %216 = vmatpush.msra.mxu0 0.0
    %217 = vmatpush.msra.mxu0 0.0
    %218 = vmatpush.msra.mxu0 0.0
    %219 = vmatpush.msra.mxu0 0.0
    %220 = vmatpush.msra.mxu0 0.0
    %221 = vmatpush.msra.mxu0 0.0
    %222 = vmatpush.msra.mxu0 0.0
    %223 = vmatpush.msra.mxu0 %v89
    %224 = vmatpush.msra.mxu0 %v88
    %225 = vmatpush.msra.mxu0 %v87
    %226 = vmatpush.msra.mxu0 %v86
    %227 = vmatmul.f32.gmra.mxu0 %v209
    %v228 = vpop.f32.mrf.mxu0
    %v229 = vadd.f32 %v204, %v228
    %230 = vdwg.mxu0
    %v231 = vadd.f32 %v229, %v104
    %v232 = vxor.u32 %v231, 2147483648
    %v233 = vmul.f32 %v232, 1.442695
    %v234 = vpow.pop %v233
    %v235 = vadd.f32 %v234, 1.0
    %v236 = vrcp.pop %v235
    %v237 = vmul.f32 %v235, %v236
    %v238 = vsub.f32 1.0, %v237
    %v239 = vmul.f32 %v236, %v238
    %v240 = vadd.f32 %v236, %v239
    %vm241 = vweird.f32 %v235
    %vm242 = vweird.f32 %v236
    %vm243 = vmor %vm241, %vm242
    %v244 = vsel %vm243, %v236, %v240
    %v245 = vand.u32 2147483647, %v235
    %vm246 = vcmp.eq.f32.partialorder %v245, 8.507059e+37
    %v247 = vand.u32 %v235, 2147483648
    %v248 = vor.u32 1.1754944e-38, %v247
    %v249 = vsel %vm246, %v248, %v244
    %v250 = vmul.f32 1.0, %v249
    %v251 = vmul.f32 %v250, 2.0
    %v252 = vsub.f32 %v251, 1.0
    %v253 = vmul.f32 %v250, 0.0
    %255 = vrot.lane.b32.xlu0 %v252, 64
    %v256 = vpop.permute.xlu0 %255
    %v258 = vmul.f32 %v250, %v256
    %260 = vrot.lane.b32.xlu0 %v258, 32
    %v261 = vpop.permute.xlu0 %260
    %v263 = vadd.f32 %v253, %v261
    %v264 = vtanh.pop %v263
    %266 = vrot.lane.b32.xlu0 %v264, 64
    %v267 = vpop.permute.xlu0 %266
    %v269 = vmul.f32 %v250, %v267
    %270 = vmatpush.msra.mxu0 0.0
    %271 = vmatpush.msra.mxu0 0.0
    %272 = vmatpush.msra.mxu0 0.0
    %273 = vmatpush.msra.mxu0 0.0
    %274 = vmatpush.msra.mxu0 0.0
    %275 = vmatpush.msra.mxu0 0.0
    %276 = vmatpush.msra.mxu0 0.0
    %277 = vmatpush.msra.mxu0 0.0
    %278 = vmatpush.msra.mxu0 0.0
    %279 = vmatpush.msra.mxu0 0.0
    %280 = vmatpush.msra.mxu0 0.0
    %281 = vmatpush.msra.mxu0 0.0
    %282 = vmatpush.msra.mxu0 %v103
    %283 = vmatpush.msra.mxu0 %v102
    %284 = vmatpush.msra.mxu0 %v101
    %285 = vmatpush.msra.mxu0 %v100
    %286 = vmatmul.f32.gmra.mxu0 %v125
    %v287 = vpop.f32.mrf.mxu0
    %v288 = vadd.f32 0.0, %v287
    %289 = vdwg.mxu0
    %291 = vrot.lane.b32.xlu0 %v269, 32
    %v292 = vpop.permute.xlu0 %291
    %v293 = vsel %vm123, %v292, 0
    %295 = vmatpush.msra.mxu0 0.0
    %296 = vmatpush.msra.mxu0 0.0
    %297 = vmatpush.msra.mxu0 0.0
    %298 = vmatpush.msra.mxu0 0.0
    %299 = vmatpush.msra.mxu0 0.0
    %300 = vmatpush.msra.mxu0 0.0
    %301 = vmatpush.msra.mxu0 0.0
    %302 = vmatpush.msra.mxu0 0.0
    %303 = vmatpush.msra.mxu0 0.0
    %304 = vmatpush.msra.mxu0 0.0
    %305 = vmatpush.msra.mxu0 0.0
    %306 = vmatpush.msra.mxu0 0.0
    %307 = vmatpush.msra.mxu0 %v94
    %308 = vmatpush.msra.mxu0 %v93
    %309 = vmatpush.msra.mxu0 %v92
    %310 = vmatpush.msra.mxu0 %v91
    %311 = vmatmul.f32.gmra.mxu0 %v293
    %v312 = vpop.f32.mrf.mxu0
    %v313 = vadd.f32 %v288, %v312
    %314 = vdwg.mxu0
    %v315 = vadd.f32 %v313, %v106
    %v316 = vxor.u32 %v315, 2147483648
    %v317 = vmul.f32 %v316, 1.442695
    %v318 = vpow.pop %v317
    %v319 = vadd.f32 %v318, 1.0
    %v320 = vrcp.pop %v319
    %v321 = vmul.f32 %v319, %v320
    %v322 = vsub.f32 1.0, %v321
    %v323 = vmul.f32 %v320, %v322
    %v324 = vadd.f32 %v320, %v323
    %vm325 = vweird.f32 %v319
    %vm326 = vweird.f32 %v320
    %vm327 = vmor %vm325, %vm326
    %v328 = vsel %vm327, %v320, %v324
    %v329 = vand.u32 2147483647, %v319
    %vm330 = vcmp.eq.f32.partialorder %v329, 8.507059e+37
    %v331 = vand.u32 %v319, 2147483648
    %v332 = vor.u32 1.1754944e-38, %v331
    %v333 = vsel %vm330, %v332, %v328
    %v334 = vmul.f32 1.0, %v333
    %v335 = vmul.f32 %v334, 2.0
    %v336 = vsub.f32 %v335, 1.0
    %v337 = vmul.f32 %v334, 0.0
    %339 = vrot.lane.b32.xlu0 %v336, 64
    %v340 = vpop.permute.xlu0 %339
    %v342 = vmul.f32 %v334, %v340
    %344 = vrot.lane.b32.xlu0 %v342, 32
    %v345 = vpop.permute.xlu0 %344
    %v347 = vadd.f32 %v337, %v345
    %v348 = vtanh.pop %v347
    %350 = vrot.lane.b32.xlu0 %v348, 64
    %v351 = vpop.permute.xlu0 %350
    %v353 = vmul.f32 %v334, %v351
    %354 = vmatpush.msra.mxu0 0.0
    %355 = vmatpush.msra.mxu0 0.0
    %356 = vmatpush.msra.mxu0 0.0
    %357 = vmatpush.msra.mxu0 0.0
    %358 = vmatpush.msra.mxu0 0.0
    %359 = vmatpush.msra.mxu0 0.0
    %360 = vmatpush.msra.mxu0 0.0
    %361 = vmatpush.msra.mxu0 0.0
    %362 = vmatpush.msra.mxu0 0.0
    %363 = vmatpush.msra.mxu0 0.0
    %364 = vmatpush.msra.mxu0 0.0
    %365 = vmatpush.msra.mxu0 0.0
    %366 = vmatpush.msra.mxu0 %v85
    %367 = vmatpush.msra.mxu0 %v84
    %368 = vmatpush.msra.mxu0 %v83
    %369 = vmatpush.msra.mxu0 %v82
    %370 = vmatmul.f32.gmra.mxu0 %v209
    %v371 = vpop.f32.mrf.mxu0
    %v372 = vadd.f32 0.0, %v371
    %373 = vdwg.mxu0
    %v375 = vrot.slane %v372, 7
    %v377 = vadd.f32 %v122, %v375
    %v378 = vxor.u32 %v377, 2147483648
    %v379 = vmul.f32 %v378, 1.442695
    %v380 = vpow.pop %v379
    %v381 = vadd.f32 %v380, 1.0
    %v382 = vrcp.pop %v381
    %v383 = vmul.f32 %v381, %v382
    %v384 = vsub.f32 1.0, %v383
    %v385 = vmul.f32 %v382, %v384
    %v386 = vadd.f32 %v382, %v385
    %vm387 = vweird.f32 %v381
    %vm388 = vweird.f32 %v382
    %vm389 = vmor %vm387, %vm388
    %v390 = vsel %vm389, %v382, %v386
    %v391 = vand.u32 2147483647, %v381
    %vm392 = vcmp.eq.f32.partialorder %v391, 8.507059e+37
    %v393 = vand.u32 %v381, 2147483648
    %v394 = vor.u32 1.1754944e-38, %v393
    %v395 = vsel %vm392, %v394, %v390
    %v396 = vmul.f32 1.0, %v395
    %v397 = vmul.f32 %v396, 2.0
    %v398 = vsub.f32 %v397, 1.0
    %v400 = vrot.slane %v179, 7
    %v402 = vmul.f32 %v396, %v400
    %404 = vrot.lane.b32.xlu0 %v398, 64
    %v405 = vpop.permute.xlu0 %404
    %v407 = vmul.f32 %v396, %v405
    %409 = vrot.lane.b32.xlu0 %v407, 32
    %v410 = vpop.permute.xlu0 %409
    %v412 = vadd.f32 %v402, %v410
    %v413 = vtanh.pop %v412
    %415 = vrot.lane.b32.xlu0 %v413, 64
    %v416 = vpop.permute.xlu0 %415
    %v418 = vmul.f32 %v396, %v416
    %419 = vmatpush.msra.mxu0 0.0
    %420 = vmatpush.msra.mxu0 0.0
    %421 = vmatpush.msra.mxu0 0.0
    %422 = vmatpush.msra.mxu0 0.0
    %423 = vmatpush.msra.mxu0 0.0
    %424 = vmatpush.msra.mxu0 0.0
    %425 = vmatpush.msra.mxu0 0.0
    %426 = vmatpush.msra.mxu0 0.0
    %427 = vmatpush.msra.mxu0 0.0
    %428 = vmatpush.msra.mxu0 0.0
    %429 = vmatpush.msra.mxu0 0.0
    %430 = vmatpush.msra.mxu0 0.0
    %431 = vmatpush.msra.mxu0 %v98
    %432 = vmatpush.msra.mxu0 %v97
    %433 = vmatpush.msra.mxu0 %v96
    %434 = vmatpush.msra.mxu0 %v95
    %435 = vmatmul.f32.gmra.mxu0 %v293
    %v436 = vpop.f32.mrf.mxu0
    %v437 = vadd.f32 0.0, %v436
    %438 = vdwg.mxu0
    %v440 = vrot.slane %v418, 1
    %441 = vrot.lane.b32.xlu0 %v440, 32
    %v442 = vpop.permute.xlu0 %441
    %v443 = vsel %vm123, %v442, 0
    %445 = vmatpush.msra.mxu0 0.0
    %446 = vmatpush.msra.mxu0 0.0
    %447 = vmatpush.msra.mxu0 0.0
    %448 = vmatpush.msra.mxu0 0.0
    %449 = vmatpush.msra.mxu0 0.0
    %450 = vmatpush.msra.mxu0 0.0
    %451 = vmatpush.msra.mxu0 0.0
    %452 = vmatpush.msra.mxu0 0.0
    %453 = vmatpush.msra.mxu0 0.0
    %454 = vmatpush.msra.mxu0 0.0
    %455 = vmatpush.msra.mxu0 0.0
    %456 = vmatpush.msra.mxu0 0.0
    %457 = vmatpush.msra.mxu0 %v89
    %458 = vmatpush.msra.mxu0 %v88
    %459 = vmatpush.msra.mxu0 %v87
    %460 = vmatpush.msra.mxu0 %v86
    %461 = vmatmul.f32.gmra.mxu0 %v443
    %v462 = vpop.f32.mrf.mxu0
    %v463 = vadd.f32 %v437, %v462
    %464 = vdwg.mxu0
    %v465 = vadd.f32 %v463, %v104
    %v466 = vxor.u32 %v465, 2147483648
    %v467 = vmul.f32 %v466, 1.442695
    %v468 = vpow.pop %v467
    %v469 = vadd.f32 %v468, 1.0
    %v470 = vrcp.pop %v469
    %v471 = vmul.f32 %v469, %v470
    %v472 = vsub.f32 1.0, %v471
    %v473 = vmul.f32 %v470, %v472
    %v474 = vadd.f32 %v470, %v473
    %vm475 = vweird.f32 %v469
    %vm476 = vweird.f32 %v470
    %vm477 = vmor %vm475, %vm476
    %v478 = vsel %vm477, %v470, %v474
    %v479 = vand.u32 2147483647, %v469
    %vm480 = vcmp.eq.f32.partialorder %v479, 8.507059e+37
    %v481 = vand.u32 %v469, 2147483648
    %v482 = vor.u32 1.1754944e-38, %v481
    %v483 = vsel %vm480, %v482, %v478
    %v484 = vmul.f32 1.0, %v483
    %v485 = vmul.f32 %v484, 2.0
    %v486 = vsub.f32 %v485, 1.0
    %v487 = vmul.f32 %v484, %v263
    %489 = vrot.lane.b32.xlu0 %v486, 64
    %v490 = vpop.permute.xlu0 %489
    %v492 = vmul.f32 %v484, %v490
    %494 = vrot.lane.b32.xlu0 %v492, 32
    %v495 = vpop.permute.xlu0 %494
    %v497 = vadd.f32 %v487, %v495
    %v498 = vtanh.pop %v497
    %500 = vrot.lane.b32.xlu0 %v498, 64
    %v501 = vpop.permute.xlu0 %500
    %v503 = vmul.f32 %v484, %v501
    %505 = vrot.lane.b32.xlu0 %v353, 32
    %v506 = vpop.permute.xlu0 %505
    %v507 = vsel %vm123, %v506, 0
    %509 = vmatpush.msra.mxu0 0.0
    %510 = vmatpush.msra.mxu0 0.0
    %511 = vmatpush.msra.mxu0 0.0
    %512 = vmatpush.msra.mxu0 0.0
    %513 = vmatpush.msra.mxu0 0.0
    %514 = vmatpush.msra.mxu0 0.0
    %515 = vmatpush.msra.mxu0 0.0
    %516 = vmatpush.msra.mxu0 0.0
    %517 = vmatpush.msra.mxu0 0.0
    %518 = vmatpush.msra.mxu0 0.0
    %519 = vmatpush.msra.mxu0 0.0
    %520 = vmatpush.msra.mxu0 0.0
    %521 = vmatpush.msra.mxu0 %v103
    %522 = vmatpush.msra.mxu0 %v102
    %523 = vmatpush.msra.mxu0 %v101
    %524 = vmatpush.msra.mxu0 %v100
    %525 = vmatmul.f32.gmra.mxu0 %v507
    %v526 = vpop.f32.mrf.mxu0
    %v527 = vadd.f32 0.0, %v526
    %528 = vdwg.mxu0
    %530 = vrot.lane.b32.xlu0 %v503, 32
    %v531 = vpop.permute.xlu0 %530
    %v532 = vsel %vm123, %v531, 0
    %534 = vmatpush.msra.mxu0 0.0
    %535 = vmatpush.msra.mxu0 0.0
    %536 = vmatpush.msra.mxu0 0.0
    %537 = vmatpush.msra.mxu0 0.0
    %538 = vmatpush.msra.mxu0 0.0
    %539 = vmatpush.msra.mxu0 0.0
    %540 = vmatpush.msra.mxu0 0.0
    %541 = vmatpush.msra.mxu0 0.0
    %542 = vmatpush.msra.mxu0 0.0
    %543 = vmatpush.msra.mxu0 0.0
    %544 = vmatpush.msra.mxu0 0.0
    %545 = vmatpush.msra.mxu0 0.0
    %546 = vmatpush.msra.mxu0 %v94
    %547 = vmatpush.msra.mxu0 %v93
    %548 = vmatpush.msra.mxu0 %v92
    %549 = vmatpush.msra.mxu0 %v91
    %550 = vmatmul.f32.gmra.mxu0 %v532
    %v551 = vpop.f32.mrf.mxu0
    %v552 = vadd.f32 %v527, %v551
    %553 = vdwg.mxu0
    %v554 = vadd.f32 %v552, %v106
    %v555 = vxor.u32 %v554, 2147483648
    %v556 = vmul.f32 %v555, 1.442695
    %v557 = vpow.pop %v556
    %v558 = vadd.f32 %v557, 1.0
    %v559 = vrcp.pop %v558
    %v560 = vmul.f32 %v558, %v559
    %v561 = vsub.f32 1.0, %v560
    %v562 = vmul.f32 %v559, %v561
    %v563 = vadd.f32 %v559, %v562
    %vm564 = vweird.f32 %v558
    %vm565 = vweird.f32 %v559
    %vm566 = vmor %vm564, %vm565
    %v567 = vsel %vm566, %v559, %v563
    %v568 = vand.u32 2147483647, %v558
    %vm569 = vcmp.eq.f32.partialorder %v568, 8.507059e+37
    %v570 = vand.u32 %v558, 2147483648
    %v571 = vor.u32 1.1754944e-38, %v570
    %v572 = vsel %vm569, %v571, %v567
    %v573 = vmul.f32 1.0, %v572
    %v574 = vmul.f32 %v573, 2.0
    %v575 = vsub.f32 %v574, 1.0
    %v576 = vmul.f32 %v573, %v347
    %578 = vrot.lane.b32.xlu0 %v575, 64
    %v579 = vpop.permute.xlu0 %578
    %v581 = vmul.f32 %v573, %v579
    %583 = vrot.lane.b32.xlu0 %v581, 32
    %v584 = vpop.permute.xlu0 %583
    %v586 = vadd.f32 %v576, %v584
    %v587 = vtanh.pop %v586
    %589 = vrot.lane.b32.xlu0 %v587, 64
    %v590 = vpop.permute.xlu0 %589
    %v592 = vmul.f32 %v573, %v590
    %593 = vmatpush.msra.mxu0 0.0
    %594 = vmatpush.msra.mxu0 0.0
    %595 = vmatpush.msra.mxu0 0.0
    %596 = vmatpush.msra.mxu0 0.0
    %597 = vmatpush.msra.mxu0 0.0
    %598 = vmatpush.msra.mxu0 0.0
    %599 = vmatpush.msra.mxu0 0.0
    %600 = vmatpush.msra.mxu0 0.0
    %601 = vmatpush.msra.mxu0 0.0
    %602 = vmatpush.msra.mxu0 0.0
    %603 = vmatpush.msra.mxu0 0.0
    %604 = vmatpush.msra.mxu0 0.0
    %605 = vmatpush.msra.mxu0 %v85
    %606 = vmatpush.msra.mxu0 %v84
    %607 = vmatpush.msra.mxu0 %v83
    %608 = vmatpush.msra.mxu0 %v82
    %609 = vmatmul.f32.gmra.mxu0 %v443
    %v610 = vpop.f32.mrf.mxu0
    %v611 = vadd.f32 0.0, %v610
    %612 = vdwg.mxu0
    %v614 = vrot.slane %v611, 6
    %v616 = vadd.f32 %v122, %v614
    %v617 = vxor.u32 %v616, 2147483648
    %v618 = vmul.f32 %v617, 1.442695
    %v619 = vpow.pop %v618
    %v620 = vadd.f32 %v619, 1.0
    %v621 = vrcp.pop %v620
    %v622 = vmul.f32 %v620, %v621
    %v623 = vsub.f32 1.0, %v622
    %v624 = vmul.f32 %v621, %v623
    %v625 = vadd.f32 %v621, %v624
    %vm626 = vweird.f32 %v620
    %vm627 = vweird.f32 %v621
    %vm628 = vmor %vm626, %vm627
    %v629 = vsel %vm628, %v621, %v625
    %v630 = vand.u32 2147483647, %v620
    %vm631 = vcmp.eq.f32.partialorder %v630, 8.507059e+37
    %v632 = vand.u32 %v620, 2147483648
    %v633 = vor.u32 1.1754944e-38, %v632
    %v634 = vsel %vm631, %v633, %v629
    %v635 = vmul.f32 1.0, %v634
    %v636 = vmul.f32 %v635, 2.0
    %v637 = vsub.f32 %v636, 1.0
    %v639 = vrot.slane %v412, 7
    %v641 = vmul.f32 %v635, %v639
    %643 = vrot.lane.b32.xlu0 %v637, 64
    %v644 = vpop.permute.xlu0 %643
    %v646 = vmul.f32 %v635, %v644
    %648 = vrot.lane.b32.xlu0 %v646, 32
    %v649 = vpop.permute.xlu0 %648
    %v651 = vadd.f32 %v641, %v649
    %v652 = vtanh.pop %v651
    %654 = vrot.lane.b32.xlu0 %v652, 64
    %v655 = vpop.permute.xlu0 %654
    %v657 = vmul.f32 %v635, %v655
    %658 = vmatpush.msra.mxu0 0.0
    %659 = vmatpush.msra.mxu0 0.0
    %660 = vmatpush.msra.mxu0 0.0
    %661 = vmatpush.msra.mxu0 0.0
    %662 = vmatpush.msra.mxu0 0.0
    %663 = vmatpush.msra.mxu0 0.0
    %664 = vmatpush.msra.mxu0 0.0
    %665 = vmatpush.msra.mxu0 0.0
    %666 = vmatpush.msra.mxu0 0.0
    %667 = vmatpush.msra.mxu0 0.0
    %668 = vmatpush.msra.mxu0 0.0
    %669 = vmatpush.msra.mxu0 0.0
    %670 = vmatpush.msra.mxu0 %v98
    %671 = vmatpush.msra.mxu0 %v97
    %672 = vmatpush.msra.mxu0 %v96
    %673 = vmatpush.msra.mxu0 %v95
    %674 = vmatmul.f32.gmra.mxu0 %v532
    %v675 = vpop.f32.mrf.mxu0
    %v676 = vadd.f32 0.0, %v675
    %677 = vdwg.mxu0
    %v679 = vrot.slane %v657, 2
    %680 = vrot.lane.b32.xlu0 %v679, 32
    %v681 = vpop.permute.xlu0 %680
    %v682 = vsel %vm123, %v681, 0
    %684 = vmatpush.msra.mxu0 0.0
    %685 = vmatpush.msra.mxu0 0.0
    %686 = vmatpush.msra.mxu0 0.0
    %687 = vmatpush.msra.mxu0 0.0
    %688 = vmatpush.msra.mxu0 0.0
    %689 = vmatpush.msra.mxu0 0.0
    %690 = vmatpush.msra.mxu0 0.0
    %691 = vmatpush.msra.mxu0 0.0
    %692 = vmatpush.msra.mxu0 0.0
    %693 = vmatpush.msra.mxu0 0.0
    %694 = vmatpush.msra.mxu0 0.0
    %695 = vmatpush.msra.mxu0 0.0
    %696 = vmatpush.msra.mxu0 %v89
    %697 = vmatpush.msra.mxu0 %v88
    %698 = vmatpush.msra.mxu0 %v87
    %699 = vmatpush.msra.mxu0 %v86
    %700 = vmatmul.f32.gmra.mxu0 %v682
    %v701 = vpop.f32.mrf.mxu0
    %v702 = vadd.f32 %v676, %v701
    %703 = vdwg.mxu0
    %v704 = vadd.f32 %v702, %v104
    %v705 = vxor.u32 %v704, 2147483648
    %v706 = vmul.f32 %v705, 1.442695
    %v707 = vpow.pop %v706
    %v708 = vadd.f32 %v707, 1.0
    %v709 = vrcp.pop %v708
    %v710 = vmul.f32 %v708, %v709
    %v711 = vsub.f32 1.0, %v710
    %v712 = vmul.f32 %v709, %v711
    %v713 = vadd.f32 %v709, %v712
    %vm714 = vweird.f32 %v708
    %vm715 = vweird.f32 %v709
    %vm716 = vmor %vm714, %vm715
    %v717 = vsel %vm716, %v709, %v713
    %v718 = vand.u32 2147483647, %v708
    %vm719 = vcmp.eq.f32.partialorder %v718, 8.507059e+37
    %v720 = vand.u32 %v708, 2147483648
    %v721 = vor.u32 1.1754944e-38, %v720
    %v722 = vsel %vm719, %v721, %v717
    %v723 = vmul.f32 1.0, %v722
    %v724 = vmul.f32 %v723, 2.0
    %v725 = vsub.f32 %v724, 1.0
    %v726 = vmul.f32 %v723, %v497
    %728 = vrot.lane.b32.xlu0 %v725, 64
    %v729 = vpop.permute.xlu0 %728
    %v731 = vmul.f32 %v723, %v729
    %733 = vrot.lane.b32.xlu0 %v731, 32
    %v734 = vpop.permute.xlu0 %733
    %v736 = vadd.f32 %v726, %v734
    %v737 = vtanh.pop %v736
    %739 = vrot.lane.b32.xlu0 %v737, 64
    %v740 = vpop.permute.xlu0 %739
    %v742 = vmul.f32 %v723, %v740
    %744 = vrot.lane.b32.xlu0 %v592, 32
    %v745 = vpop.permute.xlu0 %744
    %v746 = vsel %vm123, %v745, 0
    %748 = vmatpush.msra.mxu0 0.0
    %749 = vmatpush.msra.mxu0 0.0
    %750 = vmatpush.msra.mxu0 0.0
    %751 = vmatpush.msra.mxu0 0.0
    %752 = vmatpush.msra.mxu0 0.0
    %753 = vmatpush.msra.mxu0 0.0
    %754 = vmatpush.msra.mxu0 0.0
    %755 = vmatpush.msra.mxu0 0.0
    %756 = vmatpush.msra.mxu0 0.0
    %757 = vmatpush.msra.mxu0 0.0
    %758 = vmatpush.msra.mxu0 0.0
    %759 = vmatpush.msra.mxu0 0.0
    %760 = vmatpush.msra.mxu0 %v103
    %761 = vmatpush.msra.mxu0 %v102
    %762 = vmatpush.msra.mxu0 %v101
    %763 = vmatpush.msra.mxu0 %v100
    %764 = vmatmul.f32.gmra.mxu0 %v746
    %v765 = vpop.f32.mrf.mxu0
    %v766 = vadd.f32 0.0, %v765
    %767 = vdwg.mxu0
    %769 = vrot.lane.b32.xlu0 %v742, 32
    %v770 = vpop.permute.xlu0 %769
    %v771 = vsel %vm123, %v770, 0
    %773 = vmatpush.msra.mxu0 0.0
    %774 = vmatpush.msra.mxu0 0.0
    %775 = vmatpush.msra.mxu0 0.0
    %776 = vmatpush.msra.mxu0 0.0
    %777 = vmatpush.msra.mxu0 0.0
    %778 = vmatpush.msra.mxu0 0.0
    %779 = vmatpush.msra.mxu0 0.0
    %780 = vmatpush.msra.mxu0 0.0
    %781 = vmatpush.msra.mxu0 0.0
    %782 = vmatpush.msra.mxu0 0.0
    %783 = vmatpush.msra.mxu0 0.0
    %784 = vmatpush.msra.mxu0 0.0
    %785 = vmatpush.msra.mxu0 %v94
    %786 = vmatpush.msra.mxu0 %v93
    %787 = vmatpush.msra.mxu0 %v92
    %788 = vmatpush.msra.mxu0 %v91
    %789 = vmatmul.f32.gmra.mxu0 %v771
    %v790 = vpop.f32.mrf.mxu0
    %v791 = vadd.f32 %v766, %v790
    %792 = vdwg.mxu0
    %v793 = vadd.f32 %v791, %v106
    %v794 = vxor.u32 %v793, 2147483648
    %v795 = vmul.f32 %v794, 1.442695
    %v796 = vpow.pop %v795
    %v797 = vadd.f32 %v796, 1.0
    %v798 = vrcp.pop %v797
    %v799 = vmul.f32 %v797, %v798
    %v800 = vsub.f32 1.0, %v799
    %v801 = vmul.f32 %v798, %v800
    %v802 = vadd.f32 %v798, %v801
    %vm803 = vweird.f32 %v797
    %vm804 = vweird.f32 %v798
    %vm805 = vmor %vm803, %vm804
    %v806 = vsel %vm805, %v798, %v802
    %v807 = vand.u32 2147483647, %v797
    %vm808 = vcmp.eq.f32.partialorder %v807, 8.507059e+37
    %v809 = vand.u32 %v797, 2147483648
    %v810 = vor.u32 1.1754944e-38, %v809
    %v811 = vsel %vm808, %v810, %v806
    %v812 = vmul.f32 1.0, %v811
    %v813 = vmul.f32 %v812, 2.0
    %v814 = vsub.f32 %v813, 1.0
    %v815 = vmul.f32 %v812, %v586
    %817 = vrot.lane.b32.xlu0 %v814, 64
    %v818 = vpop.permute.xlu0 %817
    %v820 = vmul.f32 %v812, %v818
    %822 = vrot.lane.b32.xlu0 %v820, 32
    %v823 = vpop.permute.xlu0 %822
    %v825 = vadd.f32 %v815, %v823
    %v826 = vtanh.pop %v825
    %828 = vrot.lane.b32.xlu0 %v826, 64
    %v829 = vpop.permute.xlu0 %828
    %v831 = vmul.f32 %v812, %v829
    %832 = vmatpush.msra.mxu0 0.0
    %833 = vmatpush.msra.mxu0 0.0
    %834 = vmatpush.msra.mxu0 0.0
    %835 = vmatpush.msra.mxu0 0.0
    %836 = vmatpush.msra.mxu0 0.0
    %837 = vmatpush.msra.mxu0 0.0
    %838 = vmatpush.msra.mxu0 0.0
    %839 = vmatpush.msra.mxu0 0.0
    %840 = vmatpush.msra.mxu0 0.0
    %841 = vmatpush.msra.mxu0 0.0
    %842 = vmatpush.msra.mxu0 0.0
    %843 = vmatpush.msra.mxu0 0.0
    %844 = vmatpush.msra.mxu0 %v85
    %845 = vmatpush.msra.mxu0 %v84
    %846 = vmatpush.msra.mxu0 %v83
    %847 = vmatpush.msra.mxu0 %v82
    %848 = vmatmul.f32.gmra.mxu0 %v682
    %v849 = vpop.f32.mrf.mxu0
    %v850 = vadd.f32 0.0, %v849
    %851 = vdwg.mxu0
    %v853 = vrot.slane %v850, 5
    %v855 = vadd.f32 %v122, %v853
    %v856 = vxor.u32 %v855, 2147483648
    %v857 = vmul.f32 %v856, 1.442695
    %v858 = vpow.pop %v857
    %v859 = vadd.f32 %v858, 1.0
    %v860 = vrcp.pop %v859
    %v861 = vmul.f32 %v859, %v860
    %v862 = vsub.f32 1.0, %v861
    %v863 = vmul.f32 %v860, %v862
    %v864 = vadd.f32 %v860, %v863
    %vm865 = vweird.f32 %v859
    %vm866 = vweird.f32 %v860
    %vm867 = vmor %vm865, %vm866
    %v868 = vsel %vm867, %v860, %v864
    %v869 = vand.u32 2147483647, %v859
    %vm870 = vcmp.eq.f32.partialorder %v869, 8.507059e+37
    %v871 = vand.u32 %v859, 2147483648
    %v872 = vor.u32 1.1754944e-38, %v871
    %v873 = vsel %vm870, %v872, %v868
    %v874 = vmul.f32 1.0, %v873
    %v875 = vmul.f32 %v874, 2.0
    %v876 = vsub.f32 %v875, 1.0
    %v878 = vrot.slane %v651, 7
    %v880 = vmul.f32 %v874, %v878
    %882 = vrot.lane.b32.xlu0 %v876, 64
    %v883 = vpop.permute.xlu0 %882
    %v885 = vmul.f32 %v874, %v883
    %887 = vrot.lane.b32.xlu0 %v885, 32
    %v888 = vpop.permute.xlu0 %887
    %v890 = vadd.f32 %v880, %v888
    %v891 = vtanh.pop %v890
    %893 = vrot.lane.b32.xlu0 %v891, 64
    %v894 = vpop.permute.xlu0 %893
    %v896 = vmul.f32 %v874, %v894
    %897 = vmatpush.msra.mxu0 0.0
    %898 = vmatpush.msra.mxu0 0.0
    %899 = vmatpush.msra.mxu0 0.0
    %900 = vmatpush.msra.mxu0 0.0
    %901 = vmatpush.msra.mxu0 0.0
    %902 = vmatpush.msra.mxu0 0.0
    %903 = vmatpush.msra.mxu0 0.0
    %904 = vmatpush.msra.mxu0 0.0
    %905 = vmatpush.msra.mxu0 0.0
    %906 = vmatpush.msra.mxu0 0.0
    %907 = vmatpush.msra.mxu0 0.0
    %908 = vmatpush.msra.mxu0 0.0
    %909 = vmatpush.msra.mxu0 %v98
    %910 = vmatpush.msra.mxu0 %v97
    %911 = vmatpush.msra.mxu0 %v96
    %912 = vmatpush.msra.mxu0 %v95
    %913 = vmatmul.f32.gmra.mxu0 %v771
    %v914 = vpop.f32.mrf.mxu0
    %v915 = vadd.f32 0.0, %v914
    %916 = vdwg.mxu0
    %v918 = vrot.slane %v896, 3
    %919 = vrot.lane.b32.xlu0 %v918, 32
    %v920 = vpop.permute.xlu0 %919
    %v921 = vsel %vm123, %v920, 0
    %923 = vmatpush.msra.mxu0 0.0
    %924 = vmatpush.msra.mxu0 0.0
    %925 = vmatpush.msra.mxu0 0.0
    %926 = vmatpush.msra.mxu0 0.0
    %927 = vmatpush.msra.mxu0 0.0
    %928 = vmatpush.msra.mxu0 0.0
    %929 = vmatpush.msra.mxu0 0.0
    %930 = vmatpush.msra.mxu0 0.0
    %931 = vmatpush.msra.mxu0 0.0
    %932 = vmatpush.msra.mxu0 0.0
    %933 = vmatpush.msra.mxu0 0.0
    %934 = vmatpush.msra.mxu0 0.0
    %935 = vmatpush.msra.mxu0 %v89
    %936 = vmatpush.msra.mxu0 %v88
    %937 = vmatpush.msra.mxu0 %v87
    %938 = vmatpush.msra.mxu0 %v86
    %939 = vmatmul.f32.gmra.mxu0 %v921
    %v940 = vpop.f32.mrf.mxu0
    %v941 = vadd.f32 %v915, %v940
    %942 = vdwg.mxu0
    %v943 = vadd.f32 %v941, %v104
    %v944 = vxor.u32 %v943, 2147483648
    %v945 = vmul.f32 %v944, 1.442695
    %v946 = vpow.pop %v945
    %v947 = vadd.f32 %v946, 1.0
    %v948 = vrcp.pop %v947
    %v949 = vmul.f32 %v947, %v948
    %v950 = vsub.f32 1.0, %v949
    %v951 = vmul.f32 %v948, %v950
    %v952 = vadd.f32 %v948, %v951
    %vm953 = vweird.f32 %v947
    %vm954 = vweird.f32 %v948
    %vm955 = vmor %vm953, %vm954
    %v956 = vsel %vm955, %v948, %v952
    %v957 = vand.u32 2147483647, %v947
    %vm958 = vcmp.eq.f32.partialorder %v957, 8.507059e+37
    %v959 = vand.u32 %v947, 2147483648
    %v960 = vor.u32 1.1754944e-38, %v959
    %v961 = vsel %vm958, %v960, %v956
    %v962 = vmul.f32 1.0, %v961
    %v963 = vmul.f32 %v962, 2.0
    %v964 = vsub.f32 %v963, 1.0
    %v965 = vmul.f32 %v962, %v736
    %967 = vrot.lane.b32.xlu0 %v964, 64
    %v968 = vpop.permute.xlu0 %967
    %v970 = vmul.f32 %v962, %v968
    %972 = vrot.lane.b32.xlu0 %v970, 32
    %v973 = vpop.permute.xlu0 %972
    %v975 = vadd.f32 %v965, %v973
    %v976 = vtanh.pop %v975
    %978 = vrot.lane.b32.xlu0 %v976, 64
    %v979 = vpop.permute.xlu0 %978
    %v981 = vmul.f32 %v962, %v979
    %983 = vrot.lane.b32.xlu0 %v831, 32
    %v984 = vpop.permute.xlu0 %983
    %v985 = vsel %vm123, %v984, 0
    %987 = vmatpush.msra.mxu0 0.0
    %988 = vmatpush.msra.mxu0 0.0
    %989 = vmatpush.msra.mxu0 0.0
    %990 = vmatpush.msra.mxu0 0.0
    %991 = vmatpush.msra.mxu0 0.0
    %992 = vmatpush.msra.mxu0 0.0
    %993 = vmatpush.msra.mxu0 0.0
    %994 = vmatpush.msra.mxu0 0.0
    %995 = vmatpush.msra.mxu0 0.0
    %996 = vmatpush.msra.mxu0 0.0
    %997 = vmatpush.msra.mxu0 0.0
    %998 = vmatpush.msra.mxu0 0.0
    %999 = vmatpush.msra.mxu0 %v103
    %1000 = vmatpush.msra.mxu0 %v102
    %1001 = vmatpush.msra.mxu0 %v101
    %1002 = vmatpush.msra.mxu0 %v100
    %1003 = vmatmul.f32.gmra.mxu0 %v985
    %v1004 = vpop.f32.mrf.mxu0
    %v1005 = vadd.f32 0.0, %v1004
    %1006 = vdwg.mxu0
    %1008 = vrot.lane.b32.xlu0 %v981, 32
    %v1009 = vpop.permute.xlu0 %1008
    %v1010 = vsel %vm123, %v1009, 0
    %1012 = vmatpush.msra.mxu0 0.0
    %1013 = vmatpush.msra.mxu0 0.0
    %1014 = vmatpush.msra.mxu0 0.0
    %1015 = vmatpush.msra.mxu0 0.0
    %1016 = vmatpush.msra.mxu0 0.0
    %1017 = vmatpush.msra.mxu0 0.0
    %1018 = vmatpush.msra.mxu0 0.0
    %1019 = vmatpush.msra.mxu0 0.0
    %1020 = vmatpush.msra.mxu0 0.0
    %1021 = vmatpush.msra.mxu0 0.0
    %1022 = vmatpush.msra.mxu0 0.0
    %1023 = vmatpush.msra.mxu0 0.0
    %1024 = vmatpush.msra.mxu0 %v94
    %1025 = vmatpush.msra.mxu0 %v93
    %1026 = vmatpush.msra.mxu0 %v92
    %1027 = vmatpush.msra.mxu0 %v91
    %1028 = vmatmul.f32.gmra.mxu0 %v1010
    %v1029 = vpop.f32.mrf.mxu0
    %v1030 = vadd.f32 %v1005, %v1029
    %1031 = vdwg.mxu0
    %v1032 = vadd.f32 %v1030, %v106
    %v1033 = vxor.u32 %v1032, 2147483648
    %v1034 = vmul.f32 %v1033, 1.442695
    %v1035 = vpow.pop %v1034
    %v1036 = vadd.f32 %v1035, 1.0
    %v1037 = vrcp.pop %v1036
    %v1038 = vmul.f32 %v1036, %v1037
    %v1039 = vsub.f32 1.0, %v1038
    %v1040 = vmul.f32 %v1037, %v1039
    %v1041 = vadd.f32 %v1037, %v1040
    %vm1042 = vweird.f32 %v1036
    %vm1043 = vweird.f32 %v1037
    %vm1044 = vmor %vm1042, %vm1043
    %v1045 = vsel %vm1044, %v1037, %v1041
    %v1046 = vand.u32 2147483647, %v1036
    %vm1047 = vcmp.eq.f32.partialorder %v1046, 8.507059e+37
    %v1048 = vand.u32 %v1036, 2147483648
    %v1049 = vor.u32 1.1754944e-38, %v1048
    %v1050 = vsel %vm1047, %v1049, %v1045
    %v1051 = vmul.f32 1.0, %v1050
    %v1052 = vmul.f32 %v1051, 2.0
    %v1053 = vsub.f32 %v1052, 1.0
    %v1054 = vmul.f32 %v1051, %v825
    %1056 = vrot.lane.b32.xlu0 %v1053, 64
    %v1057 = vpop.permute.xlu0 %1056
    %v1059 = vmul.f32 %v1051, %v1057
    %1061 = vrot.lane.b32.xlu0 %v1059, 32
    %v1062 = vpop.permute.xlu0 %1061
    %v1064 = vadd.f32 %v1054, %v1062
    %v1065 = vtanh.pop %v1064
    %1067 = vrot.lane.b32.xlu0 %v1065, 64
    %v1068 = vpop.permute.xlu0 %1067
    %v1070 = vmul.f32 %v1051, %v1068
    %1071 = vmatpush.msra.mxu0 0.0
    %1072 = vmatpush.msra.mxu0 0.0
    %1073 = vmatpush.msra.mxu0 0.0
    %1074 = vmatpush.msra.mxu0 0.0
    %1075 = vmatpush.msra.mxu0 0.0
    %1076 = vmatpush.msra.mxu0 0.0
    %1077 = vmatpush.msra.mxu0 0.0
    %1078 = vmatpush.msra.mxu0 0.0
    %1079 = vmatpush.msra.mxu0 0.0
    %1080 = vmatpush.msra.mxu0 0.0
    %1081 = vmatpush.msra.mxu0 0.0
    %1082 = vmatpush.msra.mxu0 0.0
    %1083 = vmatpush.msra.mxu0 %v85
    %1084 = vmatpush.msra.mxu0 %v84
    %1085 = vmatpush.msra.mxu0 %v83
    %1086 = vmatpush.msra.mxu0 %v82
    %1087 = vmatmul.f32.gmra.mxu0 %v921
    %v1088 = vpop.f32.mrf.mxu0
    %v1089 = vadd.f32 0.0, %v1088
    %1090 = vdwg.mxu0
    %v1092 = vrot.slane %v1089, 4
    %v1094 = vadd.f32 %v122, %v1092
    %v1095 = vxor.u32 %v1094, 2147483648
    %v1096 = vmul.f32 %v1095, 1.442695
    %v1097 = vpow.pop %v1096
    %v1098 = vadd.f32 %v1097, 1.0
    %v1099 = vrcp.pop %v1098
    %v1100 = vmul.f32 %v1098, %v1099
    %v1101 = vsub.f32 1.0, %v1100
    %v1102 = vmul.f32 %v1099, %v1101
    %v1103 = vadd.f32 %v1099, %v1102
    %vm1104 = vweird.f32 %v1098
    %vm1105 = vweird.f32 %v1099
    %vm1106 = vmor %vm1104, %vm1105
    %v1107 = vsel %vm1106, %v1099, %v1103
    %v1108 = vand.u32 2147483647, %v1098
    %vm1109 = vcmp.eq.f32.partialorder %v1108, 8.507059e+37
    %v1110 = vand.u32 %v1098, 2147483648
    %v1111 = vor.u32 1.1754944e-38, %v1110
    %v1112 = vsel %vm1109, %v1111, %v1107
    %v1113 = vmul.f32 1.0, %v1112
    %v1114 = vmul.f32 %v1113, 2.0
    %v1115 = vsub.f32 %v1114, 1.0
    %v1117 = vrot.slane %v890, 7
    %v1119 = vmul.f32 %v1113, %v1117
    %1121 = vrot.lane.b32.xlu0 %v1115, 64
    %v1122 = vpop.permute.xlu0 %1121
    %v1124 = vmul.f32 %v1113, %v1122
    %1126 = vrot.lane.b32.xlu0 %v1124, 32
    %v1127 = vpop.permute.xlu0 %1126
    %v1129 = vadd.f32 %v1119, %v1127
    %v1130 = vtanh.pop %v1129
    %1132 = vrot.lane.b32.xlu0 %v1130, 64
    %v1133 = vpop.permute.xlu0 %1132
    %v1135 = vmul.f32 %v1113, %v1133
    %1136 = vmatpush.msra.mxu0 0.0
    %1137 = vmatpush.msra.mxu0 0.0
    %1138 = vmatpush.msra.mxu0 0.0
    %1139 = vmatpush.msra.mxu0 0.0
    %1140 = vmatpush.msra.mxu0 0.0
    %1141 = vmatpush.msra.mxu0 0.0
    %1142 = vmatpush.msra.mxu0 0.0
    %1143 = vmatpush.msra.mxu0 0.0
    %1144 = vmatpush.msra.mxu0 0.0
    %1145 = vmatpush.msra.mxu0 0.0
    %1146 = vmatpush.msra.mxu0 0.0
    %1147 = vmatpush.msra.mxu0 0.0
    %1148 = vmatpush.msra.mxu0 %v98
    %1149 = vmatpush.msra.mxu0 %v97
    %1150 = vmatpush.msra.mxu0 %v96
    %1151 = vmatpush.msra.mxu0 %v95
    %1152 = vmatmul.f32.gmra.mxu0 %v1010
    %v1153 = vpop.f32.mrf.mxu0
    %v1154 = vadd.f32 0.0, %v1153
    %1155 = vdwg.mxu0
    %v1157 = vrot.slane %v1135, 4
    %1158 = vrot.lane.b32.xlu0 %v1157, 32
    %v1159 = vpop.permute.xlu0 %1158
    %v1160 = vsel %vm123, %v1159, 0
    %1162 = vmatpush.msra.mxu0 0.0
    %1163 = vmatpush.msra.mxu0 0.0
    %1164 = vmatpush.msra.mxu0 0.0
    %1165 = vmatpush.msra.mxu0 0.0
    %1166 = vmatpush.msra.mxu0 0.0
    %1167 = vmatpush.msra.mxu0 0.0
    %1168 = vmatpush.msra.mxu0 0.0
    %1169 = vmatpush.msra.mxu0 0.0
    %1170 = vmatpush.msra.mxu0 0.0
    %1171 = vmatpush.msra.mxu0 0.0
    %1172 = vmatpush.msra.mxu0 0.0
    %1173 = vmatpush.msra.mxu0 0.0
    %1174 = vmatpush.msra.mxu0 %v89
    %1175 = vmatpush.msra.mxu0 %v88
    %1176 = vmatpush.msra.mxu0 %v87
    %1177 = vmatpush.msra.mxu0 %v86
    %1178 = vmatmul.f32.gmra.mxu0 %v1160
    %v1179 = vpop.f32.mrf.mxu0
    %v1180 = vadd.f32 %v1154, %v1179
    %1181 = vdwg.mxu0
    %v1182 = vadd.f32 %v1180, %v104
    %v1183 = vxor.u32 %v1182, 2147483648
    %v1184 = vmul.f32 %v1183, 1.442695
    %v1185 = vpow.pop %v1184
    %v1186 = vadd.f32 %v1185, 1.0
    %v1187 = vrcp.pop %v1186
    %v1188 = vmul.f32 %v1186, %v1187
    %v1189 = vsub.f32 1.0, %v1188
    %v1190 = vmul.f32 %v1187, %v1189
    %v1191 = vadd.f32 %v1187, %v1190
    %vm1192 = vweird.f32 %v1186
    %vm1193 = vweird.f32 %v1187
    %vm1194 = vmor %vm1192, %vm1193
    %v1195 = vsel %vm1194, %v1187, %v1191
    %v1196 = vand.u32 2147483647, %v1186
    %vm1197 = vcmp.eq.f32.partialorder %v1196, 8.507059e+37
    %v1198 = vand.u32 %v1186, 2147483648
    %v1199 = vor.u32 1.1754944e-38, %v1198
    %v1200 = vsel %vm1197, %v1199, %v1195
    %v1201 = vmul.f32 1.0, %v1200
    %v1202 = vmul.f32 %v1201, 2.0
    %v1203 = vsub.f32 %v1202, 1.0
    %v1204 = vmul.f32 %v1201, %v975
    %1206 = vrot.lane.b32.xlu0 %v1203, 64
    %v1207 = vpop.permute.xlu0 %1206
    %v1209 = vmul.f32 %v1201, %v1207
    %1211 = vrot.lane.b32.xlu0 %v1209, 32
    %v1212 = vpop.permute.xlu0 %1211
    %v1214 = vadd.f32 %v1204, %v1212
    %v1215 = vtanh.pop %v1214
    %1217 = vrot.lane.b32.xlu0 %v1215, 64
    %v1218 = vpop.permute.xlu0 %1217
    %v1220 = vmul.f32 %v1201, %v1218
    %1222 = vrot.lane.b32.xlu0 %v1070, 32
    %v1223 = vpop.permute.xlu0 %1222
    %v1224 = vsel %vm123, %v1223, 0
    %1226 = vmatpush.msra.mxu0 0.0
    %1227 = vmatpush.msra.mxu0 0.0
    %1228 = vmatpush.msra.mxu0 0.0
    %1229 = vmatpush.msra.mxu0 0.0
    %1230 = vmatpush.msra.mxu0 0.0
    %1231 = vmatpush.msra.mxu0 0.0
    %1232 = vmatpush.msra.mxu0 0.0
    %1233 = vmatpush.msra.mxu0 0.0
    %1234 = vmatpush.msra.mxu0 0.0
    %1235 = vmatpush.msra.mxu0 0.0
    %1236 = vmatpush.msra.mxu0 0.0
    %1237 = vmatpush.msra.mxu0 0.0
    %1238 = vmatpush.msra.mxu0 %v103
    %1239 = vmatpush.msra.mxu0 %v102
    %1240 = vmatpush.msra.mxu0 %v101
    %1241 = vmatpush.msra.mxu0 %v100
    %1242 = vmatmul.f32.gmra.mxu0 %v1224
    %v1243 = vpop.f32.mrf.mxu0
    %v1244 = vadd.f32 0.0, %v1243
    %1245 = vdwg.mxu0
    %1247 = vrot.lane.b32.xlu0 %v1220, 32
    %v1248 = vpop.permute.xlu0 %1247
    %v1249 = vsel %vm123, %v1248, 0
    %1251 = vmatpush.msra.mxu0 0.0
    %1252 = vmatpush.msra.mxu0 0.0
    %1253 = vmatpush.msra.mxu0 0.0
    %1254 = vmatpush.msra.mxu0 0.0
    %1255 = vmatpush.msra.mxu0 0.0
    %1256 = vmatpush.msra.mxu0 0.0
    %1257 = vmatpush.msra.mxu0 0.0
    %1258 = vmatpush.msra.mxu0 0.0
    %1259 = vmatpush.msra.mxu0 0.0
    %1260 = vmatpush.msra.mxu0 0.0
    %1261 = vmatpush.msra.mxu0 0.0
    %1262 = vmatpush.msra.mxu0 0.0
    %1263 = vmatpush.msra.mxu0 %v94
    %1264 = vmatpush.msra.mxu0 %v93
    %1265 = vmatpush.msra.mxu0 %v92
    %1266 = vmatpush.msra.mxu0 %v91
    %1267 = vmatmul.f32.gmra.mxu0 %v1249
    %v1268 = vpop.f32.mrf.mxu0
    %v1269 = vadd.f32 %v1244, %v1268
    %1270 = vdwg.mxu0
    %v1271 = vadd.f32 %v1269, %v106
    %v1272 = vxor.u32 %v1271, 2147483648
    %v1273 = vmul.f32 %v1272, 1.442695
    %v1274 = vpow.pop %v1273
    %v1275 = vadd.f32 %v1274, 1.0
    %v1276 = vrcp.pop %v1275
    %v1277 = vmul.f32 %v1275, %v1276
    %v1278 = vsub.f32 1.0, %v1277
    %v1279 = vmul.f32 %v1276, %v1278
    %v1280 = vadd.f32 %v1276, %v1279
    %vm1281 = vweird.f32 %v1275
    %vm1282 = vweird.f32 %v1276
    %vm1283 = vmor %vm1281, %vm1282
    %v1284 = vsel %vm1283, %v1276, %v1280
    %v1285 = vand.u32 2147483647, %v1275
    %vm1286 = vcmp.eq.f32.partialorder %v1285, 8.507059e+37
    %v1287 = vand.u32 %v1275, 2147483648
    %v1288 = vor.u32 1.1754944e-38, %v1287
    %v1289 = vsel %vm1286, %v1288, %v1284
    %v1290 = vmul.f32 1.0, %v1289
    %v1291 = vmul.f32 %v1290, 2.0
    %v1292 = vsub.f32 %v1291, 1.0
    %v1293 = vmul.f32 %v1290, %v1064
    %1295 = vrot.lane.b32.xlu0 %v1292, 64
    %v1296 = vpop.permute.xlu0 %1295
    %v1298 = vmul.f32 %v1290, %v1296
    %1300 = vrot.lane.b32.xlu0 %v1298, 32
    %v1301 = vpop.permute.xlu0 %1300
    %v1303 = vadd.f32 %v1293, %v1301
    %v1304 = vtanh.pop %v1303
    %1306 = vrot.lane.b32.xlu0 %v1304, 64
    %v1307 = vpop.permute.xlu0 %1306
    %v1309 = vmul.f32 %v1290, %v1307
    %1310 = vmatpush.msra.mxu0 0.0
    %1311 = vmatpush.msra.mxu0 0.0
    %1312 = vmatpush.msra.mxu0 0.0
    %1313 = vmatpush.msra.mxu0 0.0
    %1314 = vmatpush.msra.mxu0 0.0
    %1315 = vmatpush.msra.mxu0 0.0
    %1316 = vmatpush.msra.mxu0 0.0
    %1317 = vmatpush.msra.mxu0 0.0
    %1318 = vmatpush.msra.mxu0 0.0
    %1319 = vmatpush.msra.mxu0 0.0
    %1320 = vmatpush.msra.mxu0 0.0
    %1321 = vmatpush.msra.mxu0 0.0
    %1322 = vmatpush.msra.mxu0 %v85
    %1323 = vmatpush.msra.mxu0 %v84
    %1324 = vmatpush.msra.mxu0 %v83
    %1325 = vmatpush.msra.mxu0 %v82
    %1326 = vmatmul.f32.gmra.mxu0 %v1160
    %v1327 = vpop.f32.mrf.mxu0
    %v1328 = vadd.f32 0.0, %v1327
    %1329 = vdwg.mxu0
    %v1331 = vrot.slane %v1328, 3
    %v1333 = vadd.f32 %v122, %v1331
    %v1334 = vxor.u32 %v1333, 2147483648
    %v1335 = vmul.f32 %v1334, 1.442695
    %v1336 = vpow.pop %v1335
    %v1337 = vadd.f32 %v1336, 1.0
    %v1338 = vrcp.pop %v1337
    %v1339 = vmul.f32 %v1337, %v1338
    %v1340 = vsub.f32 1.0, %v1339
    %v1341 = vmul.f32 %v1338, %v1340
    %v1342 = vadd.f32 %v1338, %v1341
    %vm1343 = vweird.f32 %v1337
    %vm1344 = vweird.f32 %v1338
    %vm1345 = vmor %vm1343, %vm1344
    %v1346 = vsel %vm1345, %v1338, %v1342
    %v1347 = vand.u32 2147483647, %v1337
    %vm1348 = vcmp.eq.f32.partialorder %v1347, 8.507059e+37
    %v1349 = vand.u32 %v1337, 2147483648
    %v1350 = vor.u32 1.1754944e-38, %v1349
    %v1351 = vsel %vm1348, %v1350, %v1346
    %v1352 = vmul.f32 1.0, %v1351
    %v1353 = vmul.f32 %v1352, 2.0
    %v1354 = vsub.f32 %v1353, 1.0
    %v1356 = vrot.slane %v1129, 7
    %v1358 = vmul.f32 %v1352, %v1356
    %1360 = vrot.lane.b32.xlu0 %v1354, 64
    %v1361 = vpop.permute.xlu0 %1360
    %v1363 = vmul.f32 %v1352, %v1361
    %1365 = vrot.lane.b32.xlu0 %v1363, 32
    %v1366 = vpop.permute.xlu0 %1365
    %v1368 = vadd.f32 %v1358, %v1366
    %v1369 = vtanh.pop %v1368
    %1371 = vrot.lane.b32.xlu0 %v1369, 64
    %v1372 = vpop.permute.xlu0 %1371
    %v1374 = vmul.f32 %v1352, %v1372
    %1375 = vmatpush.msra.mxu0 0.0
    %1376 = vmatpush.msra.mxu0 0.0
    %1377 = vmatpush.msra.mxu0 0.0
    %1378 = vmatpush.msra.mxu0 0.0
    %1379 = vmatpush.msra.mxu0 0.0
    %1380 = vmatpush.msra.mxu0 0.0
    %1381 = vmatpush.msra.mxu0 0.0
    %1382 = vmatpush.msra.mxu0 0.0
    %1383 = vmatpush.msra.mxu0 0.0
    %1384 = vmatpush.msra.mxu0 0.0
    %1385 = vmatpush.msra.mxu0 0.0
    %1386 = vmatpush.msra.mxu0 0.0
    %1387 = vmatpush.msra.mxu0 %v98
    %1388 = vmatpush.msra.mxu0 %v97
    %1389 = vmatpush.msra.mxu0 %v96
    %1390 = vmatpush.msra.mxu0 %v95
    %1391 = vmatmul.f32.gmra.mxu0 %v1249
    %v1392 = vpop.f32.mrf.mxu0
    %v1393 = vadd.f32 0.0, %v1392
    %1394 = vdwg.mxu0
    %v1396 = vrot.slane %v1374, 5
    %1397 = vrot.lane.b32.xlu0 %v1396, 32
    %v1398 = vpop.permute.xlu0 %1397
    %v1399 = vsel %vm123, %v1398, 0
    %1401 = vmatpush.msra.mxu0 0.0
    %1402 = vmatpush.msra.mxu0 0.0
    %1403 = vmatpush.msra.mxu0 0.0
    %1404 = vmatpush.msra.mxu0 0.0
    %1405 = vmatpush.msra.mxu0 0.0
    %1406 = vmatpush.msra.mxu0 0.0
    %1407 = vmatpush.msra.mxu0 0.0
    %1408 = vmatpush.msra.mxu0 0.0
    %1409 = vmatpush.msra.mxu0 0.0
    %1410 = vmatpush.msra.mxu0 0.0
    %1411 = vmatpush.msra.mxu0 0.0
    %1412 = vmatpush.msra.mxu0 0.0
    %1413 = vmatpush.msra.mxu0 %v89
    %1414 = vmatpush.msra.mxu0 %v88
    %1415 = vmatpush.msra.mxu0 %v87
    %1416 = vmatpush.msra.mxu0 %v86
    %1417 = vmatmul.f32.gmra.mxu0 %v1399
    %v1418 = vpop.f32.mrf.mxu0
    %v1419 = vadd.f32 %v1393, %v1418
    %1420 = vdwg.mxu0
    %v1421 = vadd.f32 %v1419, %v104
    %v1422 = vxor.u32 %v1421, 2147483648
    %v1423 = vmul.f32 %v1422, 1.442695
    %v1424 = vpow.pop %v1423
    %v1425 = vadd.f32 %v1424, 1.0
    %v1426 = vrcp.pop %v1425
    %v1427 = vmul.f32 %v1425, %v1426
    %v1428 = vsub.f32 1.0, %v1427
    %v1429 = vmul.f32 %v1426, %v1428
    %v1430 = vadd.f32 %v1426, %v1429
    %vm1431 = vweird.f32 %v1425
    %vm1432 = vweird.f32 %v1426
    %vm1433 = vmor %vm1431, %vm1432
    %v1434 = vsel %vm1433, %v1426, %v1430
    %v1435 = vand.u32 2147483647, %v1425
    %vm1436 = vcmp.eq.f32.partialorder %v1435, 8.507059e+37
    %v1437 = vand.u32 %v1425, 2147483648
    %v1438 = vor.u32 1.1754944e-38, %v1437
    %v1439 = vsel %vm1436, %v1438, %v1434
    %v1440 = vmul.f32 1.0, %v1439
    %v1441 = vmul.f32 %v1440, 2.0
    %v1442 = vsub.f32 %v1441, 1.0
    %v1443 = vmul.f32 %v1440, %v1214
    %1445 = vrot.lane.b32.xlu0 %v1442, 64
    %v1446 = vpop.permute.xlu0 %1445
    %v1448 = vmul.f32 %v1440, %v1446
    %1450 = vrot.lane.b32.xlu0 %v1448, 32
    %v1451 = vpop.permute.xlu0 %1450
    %v1453 = vadd.f32 %v1443, %v1451
    %v1454 = vtanh.pop %v1453
    %1456 = vrot.lane.b32.xlu0 %v1454, 64
    %v1457 = vpop.permute.xlu0 %1456
    %v1459 = vmul.f32 %v1440, %v1457
    %1461 = vrot.lane.b32.xlu0 %v1309, 32
    %v1462 = vpop.permute.xlu0 %1461
    %v1463 = vsel %vm123, %v1462, 0
    %1465 = vmatpush.msra.mxu0 0.0
    %1466 = vmatpush.msra.mxu0 0.0
    %1467 = vmatpush.msra.mxu0 0.0
    %1468 = vmatpush.msra.mxu0 0.0
    %1469 = vmatpush.msra.mxu0 0.0
    %1470 = vmatpush.msra.mxu0 0.0
    %1471 = vmatpush.msra.mxu0 0.0
    %1472 = vmatpush.msra.mxu0 0.0
    %1473 = vmatpush.msra.mxu0 0.0
    %1474 = vmatpush.msra.mxu0 0.0
    %1475 = vmatpush.msra.mxu0 0.0
    %1476 = vmatpush.msra.mxu0 0.0
    %1477 = vmatpush.msra.mxu0 %v103
    %1478 = vmatpush.msra.mxu0 %v102
    %1479 = vmatpush.msra.mxu0 %v101
    %1480 = vmatpush.msra.mxu0 %v100
    %1481 = vmatmul.f32.gmra.mxu0 %v1463
    %v1482 = vpop.f32.mrf.mxu0
    %v1483 = vadd.f32 0.0, %v1482
    %1484 = vdwg.mxu0
    %1486 = vrot.lane.b32.xlu0 %v1459, 32
    %v1487 = vpop.permute.xlu0 %1486
    %v1488 = vsel %vm123, %v1487, 0
    %1490 = vmatpush.msra.mxu0 0.0
    %1491 = vmatpush.msra.mxu0 0.0
    %1492 = vmatpush.msra.mxu0 0.0
    %1493 = vmatpush.msra.mxu0 0.0
    %1494 = vmatpush.msra.mxu0 0.0
    %1495 = vmatpush.msra.mxu0 0.0
    %1496 = vmatpush.msra.mxu0 0.0
    %1497 = vmatpush.msra.mxu0 0.0
    %1498 = vmatpush.msra.mxu0 0.0
    %1499 = vmatpush.msra.mxu0 0.0
    %1500 = vmatpush.msra.mxu0 0.0
    %1501 = vmatpush.msra.mxu0 0.0
    %1502 = vmatpush.msra.mxu0 %v94
    %1503 = vmatpush.msra.mxu0 %v93
    %1504 = vmatpush.msra.mxu0 %v92
    %1505 = vmatpush.msra.mxu0 %v91
    %1506 = vmatmul.f32.gmra.mxu0 %v1488
    %v1507 = vpop.f32.mrf.mxu0
    %v1508 = vadd.f32 %v1483, %v1507
    %1509 = vdwg.mxu0
    %v1510 = vadd.f32 %v1508, %v106
    %v1511 = vxor.u32 %v1510, 2147483648
    %v1512 = vmul.f32 %v1511, 1.442695
    %v1513 = vpow.pop %v1512
    %v1514 = vadd.f32 %v1513, 1.0
    %v1515 = vrcp.pop %v1514
    %v1516 = vmul.f32 %v1514, %v1515
    %v1517 = vsub.f32 1.0, %v1516
    %v1518 = vmul.f32 %v1515, %v1517
    %v1519 = vadd.f32 %v1515, %v1518
    %vm1520 = vweird.f32 %v1514
    %vm1521 = vweird.f32 %v1515
    %vm1522 = vmor %vm1520, %vm1521
    %v1523 = vsel %vm1522, %v1515, %v1519
    %v1524 = vand.u32 2147483647, %v1514
    %vm1525 = vcmp.eq.f32.partialorder %v1524, 8.507059e+37
    %v1526 = vand.u32 %v1514, 2147483648
    %v1527 = vor.u32 1.1754944e-38, %v1526
    %v1528 = vsel %vm1525, %v1527, %v1523
    %v1529 = vmul.f32 1.0, %v1528
    %v1530 = vmul.f32 %v1529, 2.0
    %v1531 = vsub.f32 %v1530, 1.0
    %v1532 = vmul.f32 %v1529, %v1303
    %1534 = vrot.lane.b32.xlu0 %v1531, 64
    %v1535 = vpop.permute.xlu0 %1534
    %v1537 = vmul.f32 %v1529, %v1535
    %1539 = vrot.lane.b32.xlu0 %v1537, 32
    %v1540 = vpop.permute.xlu0 %1539
    %v1542 = vadd.f32 %v1532, %v1540
    %v1543 = vtanh.pop %v1542
    %1545 = vrot.lane.b32.xlu0 %v1543, 64
    %v1546 = vpop.permute.xlu0 %1545
    %v1548 = vmul.f32 %v1529, %v1546
    %1549 = vmatpush.msra.mxu0 0.0
    %1550 = vmatpush.msra.mxu0 0.0
    %1551 = vmatpush.msra.mxu0 0.0
    %1552 = vmatpush.msra.mxu0 0.0
    %1553 = vmatpush.msra.mxu0 0.0
    %1554 = vmatpush.msra.mxu0 0.0
    %1555 = vmatpush.msra.mxu0 0.0
    %1556 = vmatpush.msra.mxu0 0.0
    %1557 = vmatpush.msra.mxu0 0.0
    %1558 = vmatpush.msra.mxu0 0.0
    %1559 = vmatpush.msra.mxu0 0.0
    %1560 = vmatpush.msra.mxu0 0.0
    %1561 = vmatpush.msra.mxu0 %v85
    %1562 = vmatpush.msra.mxu0 %v84
    %1563 = vmatpush.msra.mxu0 %v83
    %1564 = vmatpush.msra.mxu0 %v82
    %1565 = vmatmul.f32.gmra.mxu0 %v1399
    %v1566 = vpop.f32.mrf.mxu0
    %v1567 = vadd.f32 0.0, %v1566
    %1568 = vdwg.mxu0
    %v1570 = vrot.slane %v1567, 2
    %v1572 = vadd.f32 %v122, %v1570
    %v1573 = vxor.u32 %v1572, 2147483648
    %v1574 = vmul.f32 %v1573, 1.442695
    %v1575 = vpow.pop %v1574
    %v1576 = vadd.f32 %v1575, 1.0
    %v1577 = vrcp.pop %v1576
    %v1578 = vmul.f32 %v1576, %v1577
    %v1579 = vsub.f32 1.0, %v1578
    %v1580 = vmul.f32 %v1577, %v1579
    %v1581 = vadd.f32 %v1577, %v1580
    %vm1582 = vweird.f32 %v1576
    %vm1583 = vweird.f32 %v1577
    %vm1584 = vmor %vm1582, %vm1583
    %v1585 = vsel %vm1584, %v1577, %v1581
    %v1586 = vand.u32 2147483647, %v1576
    %vm1587 = vcmp.eq.f32.partialorder %v1586, 8.507059e+37
    %v1588 = vand.u32 %v1576, 2147483648
    %v1589 = vor.u32 1.1754944e-38, %v1588
    %v1590 = vsel %vm1587, %v1589, %v1585
    %v1591 = vmul.f32 1.0, %v1590
    %v1592 = vmul.f32 %v1591, 2.0
    %v1593 = vsub.f32 %v1592, 1.0
    %v1595 = vrot.slane %v1368, 7
    %v1597 = vmul.f32 %v1591, %v1595
    %1599 = vrot.lane.b32.xlu0 %v1593, 64
    %v1600 = vpop.permute.xlu0 %1599
    %v1602 = vmul.f32 %v1591, %v1600
    %1604 = vrot.lane.b32.xlu0 %v1602, 32
    %v1605 = vpop.permute.xlu0 %1604
    %v1607 = vadd.f32 %v1597, %v1605
    %v1608 = vtanh.pop %v1607
    %1610 = vrot.lane.b32.xlu0 %v1608, 64
    %v1611 = vpop.permute.xlu0 %1610
    %v1613 = vmul.f32 %v1591, %v1611
    %1614 = vmatpush.msra.mxu0 0.0
    %1615 = vmatpush.msra.mxu0 0.0
    %1616 = vmatpush.msra.mxu0 0.0
    %1617 = vmatpush.msra.mxu0 0.0
    %1618 = vmatpush.msra.mxu0 0.0
    %1619 = vmatpush.msra.mxu0 0.0
    %1620 = vmatpush.msra.mxu0 0.0
    %1621 = vmatpush.msra.mxu0 0.0
    %1622 = vmatpush.msra.mxu0 0.0
    %1623 = vmatpush.msra.mxu0 0.0
    %1624 = vmatpush.msra.mxu0 0.0
    %1625 = vmatpush.msra.mxu0 0.0
    %1626 = vmatpush.msra.mxu0 %v98
    %1627 = vmatpush.msra.mxu0 %v97
    %1628 = vmatpush.msra.mxu0 %v96
    %1629 = vmatpush.msra.mxu0 %v95
    %1630 = vmatmul.f32.gmra.mxu0 %v1488
    %v1631 = vpop.f32.mrf.mxu0
    %v1632 = vadd.f32 0.0, %v1631
    %1633 = vdwg.mxu0
    %v1635 = vrot.slane %v1613, 6
    %1636 = vrot.lane.b32.xlu0 %v1635, 32
    %v1637 = vpop.permute.xlu0 %1636
    %v1638 = vsel %vm123, %v1637, 0
    %1640 = vmatpush.msra.mxu0 0.0
    %1641 = vmatpush.msra.mxu0 0.0
    %1642 = vmatpush.msra.mxu0 0.0
    %1643 = vmatpush.msra.mxu0 0.0
    %1644 = vmatpush.msra.mxu0 0.0
    %1645 = vmatpush.msra.mxu0 0.0
    %1646 = vmatpush.msra.mxu0 0.0
    %1647 = vmatpush.msra.mxu0 0.0
    %1648 = vmatpush.msra.mxu0 0.0
    %1649 = vmatpush.msra.mxu0 0.0
    %1650 = vmatpush.msra.mxu0 0.0
    %1651 = vmatpush.msra.mxu0 0.0
    %1652 = vmatpush.msra.mxu0 %v89
    %1653 = vmatpush.msra.mxu0 %v88
    %1654 = vmatpush.msra.mxu0 %v87
    %1655 = vmatpush.msra.mxu0 %v86
    %1656 = vmatmul.f32.gmra.mxu0 %v1638
    %v1657 = vpop.f32.mrf.mxu0
    %v1658 = vadd.f32 %v1632, %v1657
    %1659 = vdwg.mxu0
    %v1660 = vadd.f32 %v1658, %v104
    %v1661 = vxor.u32 %v1660, 2147483648
    %v1662 = vmul.f32 %v1661, 1.442695
    %v1663 = vpow.pop %v1662
    %v1664 = vadd.f32 %v1663, 1.0
    %v1665 = vrcp.pop %v1664
    %v1666 = vmul.f32 %v1664, %v1665
    %v1667 = vsub.f32 1.0, %v1666
    %v1668 = vmul.f32 %v1665, %v1667
    %v1669 = vadd.f32 %v1665, %v1668
    %vm1670 = vweird.f32 %v1664
    %vm1671 = vweird.f32 %v1665
    %vm1672 = vmor %vm1670, %vm1671
    %v1673 = vsel %vm1672, %v1665, %v1669
    %v1674 = vand.u32 2147483647, %v1664
    %vm1675 = vcmp.eq.f32.partialorder %v1674, 8.507059e+37
    %v1676 = vand.u32 %v1664, 2147483648
    %v1677 = vor.u32 1.1754944e-38, %v1676
    %v1678 = vsel %vm1675, %v1677, %v1673
    %v1679 = vmul.f32 1.0, %v1678
    %v1680 = vmul.f32 %v1679, 2.0
    %v1681 = vsub.f32 %v1680, 1.0
    %v1682 = vmul.f32 %v1679, %v1453
    %1684 = vrot.lane.b32.xlu0 %v1681, 64
    %v1685 = vpop.permute.xlu0 %1684
    %v1687 = vmul.f32 %v1679, %v1685
    %1689 = vrot.lane.b32.xlu0 %v1687, 32
    %v1690 = vpop.permute.xlu0 %1689
    %v1692 = vadd.f32 %v1682, %v1690
    %v1693 = vtanh.pop %v1692
    %1695 = vrot.lane.b32.xlu0 %v1693, 64
    %v1696 = vpop.permute.xlu0 %1695
    %v1698 = vmul.f32 %v1679, %v1696
    %1700 = vrot.lane.b32.xlu0 %v1548, 32
    %v1701 = vpop.permute.xlu0 %1700
    %v1702 = vsel %vm123, %v1701, 0
    %1704 = vmatpush.msra.mxu0 0.0
    %1705 = vmatpush.msra.mxu0 0.0
    %1706 = vmatpush.msra.mxu0 0.0
    %1707 = vmatpush.msra.mxu0 0.0
    %1708 = vmatpush.msra.mxu0 0.0
    %1709 = vmatpush.msra.mxu0 0.0
    %1710 = vmatpush.msra.mxu0 0.0
    %1711 = vmatpush.msra.mxu0 0.0
    %1712 = vmatpush.msra.mxu0 0.0
    %1713 = vmatpush.msra.mxu0 0.0
    %1714 = vmatpush.msra.mxu0 0.0
    %1715 = vmatpush.msra.mxu0 0.0
    %1716 = vmatpush.msra.mxu0 %v103
    %1717 = vmatpush.msra.mxu0 %v102
    %1718 = vmatpush.msra.mxu0 %v101
    %1719 = vmatpush.msra.mxu0 %v100
    %1720 = vmatmul.f32.gmra.mxu0 %v1702
    %v1721 = vpop.f32.mrf.mxu0
    %v1722 = vadd.f32 0.0, %v1721
    %1723 = vdwg.mxu0
    %1725 = vrot.lane.b32.xlu0 %v1698, 32
    %v1726 = vpop.permute.xlu0 %1725
    %v1727 = vsel %vm123, %v1726, 0
    %1729 = vmatpush.msra.mxu0 0.0
    %1730 = vmatpush.msra.mxu0 0.0
    %1731 = vmatpush.msra.mxu0 0.0
    %1732 = vmatpush.msra.mxu0 0.0
    %1733 = vmatpush.msra.mxu0 0.0
    %1734 = vmatpush.msra.mxu0 0.0
    %1735 = vmatpush.msra.mxu0 0.0
    %1736 = vmatpush.msra.mxu0 0.0
    %1737 = vmatpush.msra.mxu0 0.0
    %1738 = vmatpush.msra.mxu0 0.0
    %1739 = vmatpush.msra.mxu0 0.0
    %1740 = vmatpush.msra.mxu0 0.0
    %1741 = vmatpush.msra.mxu0 %v94
    %1742 = vmatpush.msra.mxu0 %v93
    %1743 = vmatpush.msra.mxu0 %v92
    %1744 = vmatpush.msra.mxu0 %v91
    %1745 = vmatmul.f32.gmra.mxu0 %v1727
    %v1746 = vpop.f32.mrf.mxu0
    %v1747 = vadd.f32 %v1722, %v1746
    %1748 = vdwg.mxu0
    %v1749 = vadd.f32 %v1747, %v106
    %v1750 = vxor.u32 %v1749, 2147483648
    %v1751 = vmul.f32 %v1750, 1.442695
    %v1752 = vpow.pop %v1751
    %v1753 = vadd.f32 %v1752, 1.0
    %v1754 = vrcp.pop %v1753
    %v1755 = vmul.f32 %v1753, %v1754
    %v1756 = vsub.f32 1.0, %v1755
    %v1757 = vmul.f32 %v1754, %v1756
    %v1758 = vadd.f32 %v1754, %v1757
    %vm1759 = vweird.f32 %v1753
    %vm1760 = vweird.f32 %v1754
    %vm1761 = vmor %vm1759, %vm1760
    %v1762 = vsel %vm1761, %v1754, %v1758
    %v1763 = vand.u32 2147483647, %v1753
    %vm1764 = vcmp.eq.f32.partialorder %v1763, 8.507059e+37
    %v1765 = vand.u32 %v1753, 2147483648
    %v1766 = vor.u32 1.1754944e-38, %v1765
    %v1767 = vsel %vm1764, %v1766, %v1762
    %v1768 = vmul.f32 1.0, %v1767
    %v1769 = vmul.f32 %v1768, 2.0
    %v1770 = vsub.f32 %v1769, 1.0
    %v1771 = vmul.f32 %v1768, %v1542
    %1773 = vrot.lane.b32.xlu0 %v1770, 64
    %v1774 = vpop.permute.xlu0 %1773
    %v1776 = vmul.f32 %v1768, %v1774
    %1778 = vrot.lane.b32.xlu0 %v1776, 32
    %v1779 = vpop.permute.xlu0 %1778
    %v1781 = vadd.f32 %v1771, %v1779
    %v1782 = vtanh.pop %v1781
    %1784 = vrot.lane.b32.xlu0 %v1782, 64
    %v1785 = vpop.permute.xlu0 %1784
    %v1787 = vmul.f32 %v1768, %v1785
    %1788 = vmatpush.msra.mxu0 0.0
    %1789 = vmatpush.msra.mxu0 0.0
    %1790 = vmatpush.msra.mxu0 0.0
    %1791 = vmatpush.msra.mxu0 0.0
    %1792 = vmatpush.msra.mxu0 0.0
    %1793 = vmatpush.msra.mxu0 0.0
    %1794 = vmatpush.msra.mxu0 0.0
    %1795 = vmatpush.msra.mxu0 0.0
    %1796 = vmatpush.msra.mxu0 0.0
    %1797 = vmatpush.msra.mxu0 0.0
    %1798 = vmatpush.msra.mxu0 0.0
    %1799 = vmatpush.msra.mxu0 0.0
    %1800 = vmatpush.msra.mxu0 %v85
    %1801 = vmatpush.msra.mxu0 %v84
    %1802 = vmatpush.msra.mxu0 %v83
    %1803 = vmatpush.msra.mxu0 %v82
    %1804 = vmatmul.f32.gmra.mxu0 %v1638
    %v1805 = vpop.f32.mrf.mxu0
    %v1806 = vadd.f32 0.0, %v1805
    %1807 = vdwg.mxu0
    %v1809 = vrot.slane %v1806, 1
    %v1811 = vadd.f32 %v122, %v1809
    %v1812 = vxor.u32 %v1811, 2147483648
    %v1813 = vmul.f32 %v1812, 1.442695
    %v1814 = vpow.pop %v1813
    %v1815 = vadd.f32 %v1814, 1.0
    %v1816 = vrcp.pop %v1815
    %v1817 = vmul.f32 %v1815, %v1816
    %v1818 = vsub.f32 1.0, %v1817
    %v1819 = vmul.f32 %v1816, %v1818
    %v1820 = vadd.f32 %v1816, %v1819
    %vm1821 = vweird.f32 %v1815
    %vm1822 = vweird.f32 %v1816
    %vm1823 = vmor %vm1821, %vm1822
    %v1824 = vsel %vm1823, %v1816, %v1820
    %v1825 = vand.u32 2147483647, %v1815
    %vm1826 = vcmp.eq.f32.partialorder %v1825, 8.507059e+37
    %v1827 = vand.u32 %v1815, 2147483648
    %v1828 = vor.u32 1.1754944e-38, %v1827
    %v1829 = vsel %vm1826, %v1828, %v1824
    %v1830 = vmul.f32 1.0, %v1829
    %v1831 = vmul.f32 %v1830, 2.0
    %v1832 = vsub.f32 %v1831, 1.0
    %v1834 = vrot.slane %v1607, 7
    %v1836 = vmul.f32 %v1830, %v1834
    %1838 = vrot.lane.b32.xlu0 %v1832, 64
    %v1839 = vpop.permute.xlu0 %1838
    %v1841 = vmul.f32 %v1830, %v1839
    %1843 = vrot.lane.b32.xlu0 %v1841, 32
    %v1844 = vpop.permute.xlu0 %1843
    %v1846 = vadd.f32 %v1836, %v1844
    %v1847 = vtanh.pop %v1846
    %1849 = vrot.lane.b32.xlu0 %v1847, 64
    %v1850 = vpop.permute.xlu0 %1849
    %v1852 = vmul.f32 %v1830, %v1850
    %1853 = vmatpush.msra.mxu0 0.0
    %1854 = vmatpush.msra.mxu0 0.0
    %1855 = vmatpush.msra.mxu0 0.0
    %1856 = vmatpush.msra.mxu0 0.0
    %1857 = vmatpush.msra.mxu0 0.0
    %1858 = vmatpush.msra.mxu0 0.0
    %1859 = vmatpush.msra.mxu0 0.0
    %1860 = vmatpush.msra.mxu0 0.0
    %1861 = vmatpush.msra.mxu0 0.0
    %1862 = vmatpush.msra.mxu0 0.0
    %1863 = vmatpush.msra.mxu0 0.0
    %1864 = vmatpush.msra.mxu0 0.0
    %1865 = vmatpush.msra.mxu0 %v98
    %1866 = vmatpush.msra.mxu0 %v97
    %1867 = vmatpush.msra.mxu0 %v96
    %1868 = vmatpush.msra.mxu0 %v95
    %1869 = vmatmul.f32.gmra.mxu0 %v1727
    %v1870 = vpop.f32.mrf.mxu0
    %v1871 = vadd.f32 0.0, %v1870
    %1872 = vdwg.mxu0
    %v1874 = vrot.slane %v1852, 7
    %1875 = vrot.lane.b32.xlu0 %v1874, 32
    %v1876 = vpop.permute.xlu0 %1875
    %v1877 = vsel %vm123, %v1876, 0
    %1879 = vmatpush.msra.mxu0 0.0
    %1880 = vmatpush.msra.mxu0 0.0
    %1881 = vmatpush.msra.mxu0 0.0
    %1882 = vmatpush.msra.mxu0 0.0
    %1883 = vmatpush.msra.mxu0 0.0
    %1884 = vmatpush.msra.mxu0 0.0
    %1885 = vmatpush.msra.mxu0 0.0
    %1886 = vmatpush.msra.mxu0 0.0
    %1887 = vmatpush.msra.mxu0 0.0
    %1888 = vmatpush.msra.mxu0 0.0
    %1889 = vmatpush.msra.mxu0 0.0
    %1890 = vmatpush.msra.mxu0 0.0
    %1891 = vmatpush.msra.mxu0 %v89
    %1892 = vmatpush.msra.mxu0 %v88
    %1893 = vmatpush.msra.mxu0 %v87
    %1894 = vmatpush.msra.mxu0 %v86
    %1895 = vmatmul.f32.gmra.mxu0 %v1877
    %v1896 = vpop.f32.mrf.mxu0
    %v1897 = vadd.f32 %v1871, %v1896
    %1898 = vdwg.mxu0
    %v1899 = vadd.f32 %v1897, %v104
    %v1900 = vxor.u32 %v1899, 2147483648
    %v1901 = vmul.f32 %v1900, 1.442695
    %v1902 = vpow.pop %v1901
    %v1903 = vadd.f32 %v1902, 1.0
    %v1904 = vrcp.pop %v1903
    %v1905 = vmul.f32 %v1903, %v1904
    %v1906 = vsub.f32 1.0, %v1905
    %v1907 = vmul.f32 %v1904, %v1906
    %v1908 = vadd.f32 %v1904, %v1907
    %vm1909 = vweird.f32 %v1903
    %vm1910 = vweird.f32 %v1904
    %vm1911 = vmor %vm1909, %vm1910
    %v1912 = vsel %vm1911, %v1904, %v1908
    %v1913 = vand.u32 2147483647, %v1903
    %vm1914 = vcmp.eq.f32.partialorder %v1913, 8.507059e+37
    %v1915 = vand.u32 %v1903, 2147483648
    %v1916 = vor.u32 1.1754944e-38, %v1915
    %v1917 = vsel %vm1914, %v1916, %v1912
    %v1918 = vmul.f32 1.0, %v1917
    %v1919 = vmul.f32 %v1918, 2.0
    %v1920 = vsub.f32 %v1919, 1.0
    %v1921 = vmul.f32 %v1918, %v1692
    %1923 = vrot.lane.b32.xlu0 %v1920, 64
    %v1924 = vpop.permute.xlu0 %1923
    %v1926 = vmul.f32 %v1918, %v1924
    %1928 = vrot.lane.b32.xlu0 %v1926, 32
    %v1929 = vpop.permute.xlu0 %1928
    %v1931 = vadd.f32 %v1921, %v1929
    %v1932 = vtanh.pop %v1931
    %1934 = vrot.lane.b32.xlu0 %v1932, 64
    %v1935 = vpop.permute.xlu0 %1934
    %v1937 = vmul.f32 %v1918, %v1935
    %1939 = vrot.lane.b32.xlu0 %v1787, 32
    %v1940 = vpop.permute.xlu0 %1939
    %v1941 = vsel %vm123, %v1940, 0
    %1943 = vmatpush.msra.mxu0 0.0
    %1944 = vmatpush.msra.mxu0 0.0
    %1945 = vmatpush.msra.mxu0 0.0
    %1946 = vmatpush.msra.mxu0 0.0
    %1947 = vmatpush.msra.mxu0 0.0
    %1948 = vmatpush.msra.mxu0 0.0
    %1949 = vmatpush.msra.mxu0 0.0
    %1950 = vmatpush.msra.mxu0 0.0
    %1951 = vmatpush.msra.mxu0 0.0
    %1952 = vmatpush.msra.mxu0 0.0
    %1953 = vmatpush.msra.mxu0 0.0
    %1954 = vmatpush.msra.mxu0 0.0
    %1955 = vmatpush.msra.mxu0 %v103
    %1956 = vmatpush.msra.mxu0 %v102
    %1957 = vmatpush.msra.mxu0 %v101
    %1958 = vmatpush.msra.mxu0 %v100
    %1959 = vmatmul.f32.gmra.mxu0 %v1941
    %v1960 = vpop.f32.mrf.mxu0
    %v1961 = vadd.f32 0.0, %v1960
    %1962 = vdwg.mxu0
    %1964 = vrot.lane.b32.xlu0 %v1937, 32
    %v1965 = vpop.permute.xlu0 %1964
    %v1966 = vsel %vm123, %v1965, 0
    %1968 = vmatpush.msra.mxu0 0.0
    %1969 = vmatpush.msra.mxu0 0.0
    %1970 = vmatpush.msra.mxu0 0.0
    %1971 = vmatpush.msra.mxu0 0.0
    %1972 = vmatpush.msra.mxu0 0.0
    %1973 = vmatpush.msra.mxu0 0.0
    %1974 = vmatpush.msra.mxu0 0.0
    %1975 = vmatpush.msra.mxu0 0.0
    %1976 = vmatpush.msra.mxu0 0.0
    %1977 = vmatpush.msra.mxu0 0.0
    %1978 = vmatpush.msra.mxu0 0.0
    %1979 = vmatpush.msra.mxu0 0.0
    %1980 = vmatpush.msra.mxu0 %v94
    %1981 = vmatpush.msra.mxu0 %v93
    %1982 = vmatpush.msra.mxu0 %v92
    %1983 = vmatpush.msra.mxu0 %v91
    %1984 = vmatmul.f32.gmra.mxu0 %v1966
    %v1985 = vpop.f32.mrf.mxu0
    %v1986 = vadd.f32 %v1961, %v1985
    %1987 = vdwg.mxu0
    %v1988 = vadd.f32 %v1986, %v106
    %v1989 = vxor.u32 %v1988, 2147483648
    %v1990 = vmul.f32 %v1989, 1.442695
    %v1991 = vpow.pop %v1990
    %v1992 = vadd.f32 %v1991, 1.0
    %v1993 = vrcp.pop %v1992
    %v1994 = vmul.f32 %v1992, %v1993
    %v1995 = vsub.f32 1.0, %v1994
    %v1996 = vmul.f32 %v1993, %v1995
    %v1997 = vadd.f32 %v1993, %v1996
    %vm1998 = vweird.f32 %v1992
    %vm1999 = vweird.f32 %v1993
    %vm2000 = vmor %vm1998, %vm1999
    %v2001 = vsel %vm2000, %v1993, %v1997
    %v2002 = vand.u32 2147483647, %v1992
    %vm2003 = vcmp.eq.f32.partialorder %v2002, 8.507059e+37
    %v2004 = vand.u32 %v1992, 2147483648
    %v2005 = vor.u32 1.1754944e-38, %v2004
    %v2006 = vsel %vm2003, %v2005, %v2001
    %v2007 = vmul.f32 1.0, %v2006
    %v2008 = vmul.f32 %v2007, 2.0
    %v2009 = vsub.f32 %v2008, 1.0
    %v2010 = vmul.f32 %v2007, %v1781
    %2012 = vrot.lane.b32.xlu0 %v2009, 64
    %v2013 = vpop.permute.xlu0 %2012
    %v2015 = vmul.f32 %v2007, %v2013
    %2017 = vrot.lane.b32.xlu0 %v2015, 32
    %v2018 = vpop.permute.xlu0 %2017
    %v2020 = vadd.f32 %v2010, %v2018
    %v2021 = vtanh.pop %v2020
    %2023 = vrot.lane.b32.xlu0 %v2021, 64
    %v2024 = vpop.permute.xlu0 %2023
    %v2026 = vmul.f32 %v2007, %v2024
    %v2027 = vld [vmem:[%s7] sm:$0x1]
    %v2029 = vperm.slane %v2027, 0
    %2030 = vrot.lane.b32.xlu0 %v2029, 96
    %v2031 = vpop.permute.xlu0 %2030
    %v2033 = vmul.f32 %v2026, %v2031
    %2035 = vrot.lane.b32.xlu0 %v2033, 32
    %v2036 = vpop.permute.xlu0 %2035
    %vm2038 = vcmask 253952
    %v2039 = vsel %vm2038, %v2036, 0.0
    %2040 = vadd.xlane.f32.xlu0 %v2039
    %v2041 = vpop.xlane.xlu0 %2040
    %v2042 = vld [vmem:[#allocation2] sm:$0x1]
    %v2043 = vadd.f32 %v2041, %v2042
    %vm2044 = vcmask 0
    %2045 = vst.msk [vmem:[#allocation9] sm:$0x1] %vm2044, %v2043
    // Predicated region
    $region50: #{tpu_custom_call.1} parent=1 // pred_check
      _
    $region51: #{tpu_custom_call.1} parent=1 // pred_check_branch
      %2047 = sbr.rel (0) target = $region53
    $region52: #{tpu_custom_call.1} parent=1 // pred_region
      %2049 = vsyncadd [#allocation5], 0
      %s2051 = sshll.u32 [#allocation9], 4
      %s2052 = int_to_ptr.vmem [resolvable:$true] %s2051
      %s2053 = sshll.u32 %s9, 4
      %s2054 = int_to_ptr.hbm [resolvable:$true] %s2053
      %2056 = dma.vmem_to_hbm [thread:$0]  %s2052, 16, %s2054, [#allocation5]
    $region53: #{tpu_custom_call.1} parent=1 // pred_fallthru
      _
    // Predicated region
    $region54: #{tpu_custom_call.1} parent=1 // pred_check
      _
    $region55: #{tpu_custom_call.1} parent=1 // pred_check_branch
      %2058 = sbr.rel (0) target = $region57
    $region56: #{tpu_custom_call.1} parent=1 // pred_region
      %2060 = dma.done [#allocation5], 16
    $region57: #{tpu_custom_call.1} parent=1 // pred_fallthru
      _
    %2061 = vsyncpa [#allocation4], 1
    %2062 = vsyncpa [#allocation7], 1
    %2063 = vsyncpa [#allocation5], 1

</llo_original>
